<compile_context>
chip_gen: v7x
topology: tpu7x:2x2x1
jax: 0.10.0
libtpu: 0.0.40
codegen_flags: <defaults>
</compile_context>

<pallas_src>
import functools

import jax
import jax.numpy as jnp
from jax.experimental import pallas as pl
from jax.experimental.pallas import tpu as pltpu

LANE = 128  # vreg lane width / MXU-friendly padding


def _round_up(v, m):
    return ((v + m - 1) // m) * m


def _pad2(a, rows, cols):
    return jnp.pad(a, ((0, rows - a.shape[0]), (0, cols - a.shape[1])))


def _vmem_limit_bytes():
    """Generation-aware VMEM budget: ~3/4 of physical (v5e/v6e 128 MiB, v7x 64 MiB)."""
    cap = 64 * 1024 * 1024  # conservative fallback == v7x physical VMEM
    try:
        cap = int(pltpu.get_tpu_info().vmem_capacity_bytes)
    except Exception:
        pass
    return min(100 * 1024 * 1024, max(32 * 1024 * 1024, (cap * 3) // 4))


@functools.lru_cache(maxsize=None)
def _buffered_ok(buffers: int) -> bool:
    """Probe once (eagerly) whether pipeline_mode=pl.Buffered(buffers) compiles here."""
    try:
        def _k(x_ref, o_ref):
            o_ref[...] = x_ref[...] + 1.0

        out = pl.pallas_call(
            _k,
            out_shape=jax.ShapeDtypeStruct((8, 128), jnp.float32),
            grid=(4,),
            in_specs=[pl.BlockSpec((8, 128), lambda i: (0, 0),
                                   pipeline_mode=pl.Buffered(buffers))],
            out_specs=pl.BlockSpec((8, 128), lambda i: (0, 0)),
        )(jnp.zeros((8, 128), jnp.float32))
        jax.block_until_ready(out)
        return True
    except Exception:
        return False


def _spec(shape, index_map, buffers=None):
    """BlockSpec with an optional explicit pipeline depth; graceful fallback."""
    if buffers is not None and _buffered_ok(buffers):
        return pl.BlockSpec(shape, index_map, pipeline_mode=pl.Buffered(buffers))
    return pl.BlockSpec(shape, index_map)


# ------------------------------------------------------------------ kernels ----
def feat_kernel(x_ref, w_ref, o_ref):
    """S1 = X @ W1  (row-tiled, W1 resident; bf16 in, f32 MXU accumulate, bf16 out)."""
    o_ref[...] = jnp.dot(x_ref[...], w_ref[...],
                         preferred_element_type=jnp.float32).astype(o_ref.dtype)


def gcn_hidden_kernel(adj_ref, s1_ref, w2_ref, b1_ref, out_ref, acc_ref, *,
                      tk, s_resident):
    """S2 = relu(adj @ S1 + b1) @ W2, accumulated over the adj contraction axis."""
    k = pl.program_id(1)

    @pl.when(k == 0)
    def _init():
        acc_ref[...] = jnp.zeros_like(acc_ref)

    if s_resident:
        # S1 stays VMEM-resident (constant index_map, single buffer); slice its k-chunk.
        kk = pl.multiple_of(k * tk, tk)
        s1_blk = s1_ref[pl.ds(kk, tk), :]
    else:
        # S1 streamed k-blocked alongside adj (large-N / v7x fallback).
        s1_blk = s1_ref[...]
    acc_ref[...] += jnp.dot(adj_ref[...], s1_blk, preferred_element_type=jnp.float32)

    @pl.when(k == pl.num_programs(1) - 1)
    def _finalize():
        # bias + relu + layer-2 feature transform applied once per row tile only.
        h1 = jnp.maximum(acc_ref[...] + b1_ref[...], 0.0)
        out_ref[...] = jnp.dot(h1.astype(jnp.bfloat16), w2_ref[...],
                               preferred_element_type=jnp.float32).astype(out_ref.dtype)


def gcn_out_kernel(adj_ref, s2_ref, wc_ref, b2_ref, bc_ref, out_ref, acc_ref, *,
                   tk, n_classes, s_resident):
    """out = log_softmax((adj @ S2 + b2) @ Wc + bc) on a lane-dense padded class dim."""
    k = pl.program_id(1)

    @pl.when(k == 0)
    def _init():
        acc_ref[...] = jnp.zeros_like(acc_ref)

    if s_resident:
        kk = pl.multiple_of(k * tk, tk)
        s2_blk = s2_ref[pl.ds(kk, tk), :]
    else:
        s2_blk = s2_ref[...]
    acc_ref[...] += jnp.dot(adj_ref[...], s2_blk, preferred_element_type=jnp.float32)

    @pl.when(k == pl.num_programs(1) - 1)
    def _finalize():
        h2 = acc_ref[...] + b2_ref[...]
        logits = jnp.dot(h2.astype(jnp.bfloat16), wc_ref[...],
                         preferred_element_type=jnp.float32) + bc_ref[...]
        # padded class lanes must not take part in the softmax normalization
        col = jax.lax.broadcasted_iota(jnp.int32, logits.shape, 1)
        valid = col < n_classes
        logits = jnp.where(valid, logits, -1e30)   # safe in f32 (max subtracted first)
        m = jnp.max(logits, axis=1, keepdims=True)
        z = logits - m
        p = jnp.where(valid, jnp.exp(z), 0.0)
        lse = jnp.log(jnp.sum(p, axis=1, keepdims=True))
        out_ref[...] = z - lse


# ------------------------------------------------------------------ wrapper ----
def _pick_tiles(n_pad):
    """Largest adjacency tiles (<=512) dividing n_pad; keep >= 2 row tiles so the
    'parallel' row axis can still shard across v7x's two TensorCores."""
    def best(cap, min_blocks):
        for cand in (512, 384, 256, 128):
            if cand <= cap and n_pad % cand == 0 and n_pad // cand >= min_blocks:
                return cand
        return LANE
    tk = best(512, 1)
    tm = best(512, 2)
    return tm, tk


def node_classifier_forward(x, adj, params):
    """x: (N, F) float32, adj: (N, N) float32 dense normalized adjacency."""
    n, f = x.shape
    hidden = params["w1"].shape[1]
    n_classes = params["wc"].shape[1]

    # lane-dense (128) padding of feature/hidden/class dims; node dim padded to 128
    # and bumped to a 256/512 multiple only when cheap (adj padding cost is quadratic).
    f_pad = _round_up(f, LANE)
    h_pad = _round_up(hidden, LANE)
    c_pad = _round_up(n_classes, LANE)
    n_pad = _round_up(n, LANE)
    for mult in (512, 256):
        cand = _round_up(n, mult)
        if cand - n_pad <= n_pad // 8:
            n_pad = cand
            break

    tm, tk = _pick_tiles(n_pad)
    n_rt = n_pad // tm
    n_kt = n_pad // tk
    adj_bufs = 3 if n_kt >= 3 else None          # deeper adj pipelining when useful

    vmem_limit = _vmem_limit_bytes()

    # Keep S1/S2 fully VMEM-resident (read once per layer) only while they fit the
    # budget; otherwise stream them k-blocked alongside adj (guards v7x's 64 MiB VMEM).
    fixed_bytes = ((3 if adj_bufs else 2) * tm * tk * 2          # adj tile buffers
                   + h_pad * h_pad * 2 + h_pad * c_pad * 2       # W2 / Wc (1 buffer)
                   + 2 * (h_pad + c_pad) * 4                     # biases
                   + 2 * tm * max(h_pad * 2, c_pad * 4)          # output blocks
                   + tm * h_pad * 4)                             # f32 accumulator
    s_resident = (n_pad * h_pad * 2 + fixed_bytes) <= (vmem_limit - (8 << 20))

    # bf16 operands (f32 accumulation inside the kernels); biases stay f32.
    xp = _pad2(x, n_pad, f_pad).astype(jnp.bfloat16)
    adjp = _pad2(adj, n_pad, n_pad).astype(jnp.bfloat16)
    w1 = _pad2(params["w1"], f_pad, h_pad).astype(jnp.bfloat16)
    w2 = _pad2(params["w2"], h_pad, h_pad).astype(jnp.bfloat16)
    wc = _pad2(params["wc"], h_pad, c_pad).astype(jnp.bfloat16)
    b1 = _pad2(params["b1"], 1, h_pad)
    b2 = _pad2(params["b2"], 1, h_pad)
    bc = _pad2(params["bc"], 1, c_pad)

    cparams_2d = pltpu.CompilerParams(
        dimension_semantics=("parallel", "arbitrary"),   # row tiles shard across TCs
        vmem_limit_bytes=vmem_limit)
    cparams_1d = pltpu.CompilerParams(
        dimension_semantics=("parallel",),
        vmem_limit_bytes=vmem_limit)

    # --- stage 1: S1 = Xp @ W1 ---------------------------------------------------
    # TODO(synk): could be fused into stage 2's first row tile; adj traffic dominates
    #             for large N so this is kept as a separate (cheap) call.
    s1 = pl.pallas_call(
        feat_kernel,
        out_shape=jax.ShapeDtypeStruct((n_pad, h_pad), jnp.bfloat16),
        grid=(n_rt,),
        in_specs=[pl.BlockSpec((tm, f_pad), lambda i: (i, 0)),
                  _spec((f_pad, h_pad), lambda i: (0, 0), buffers=1)],   # W1 resident
        out_specs=pl.BlockSpec((tm, h_pad), lambda i: (i, 0)),
        compiler_params=cparams_1d,
    )(xp, w1)

    if s_resident:
        s1_spec = _spec((n_pad, h_pad), lambda i, k: (0, 0), buffers=1)  # whole S1 resident
        s2_spec = _spec((n_pad, h_pad), lambda i, k: (0, 0), buffers=1)
    else:
        s1_spec = pl.BlockSpec((tk, h_pad), lambda i, k: (k, 0))         # streamed per k
        s2_spec = pl.BlockSpec((tk, h_pad), lambda i, k: (k, 0))

    # --- stage 2: S2 = relu(adj @ S1 + b1) @ W2  (adj streamed exactly once) ------
    s2 = pl.pallas_call(
        functools.partial(gcn_hidden_kernel, tk=tk, s_resident=s_resident),
        out_shape=jax.ShapeDtypeStruct((n_pad, h_pad), jnp.bfloat16),
        grid=(n_rt, n_kt),
        in_specs=[_spec((tm, tk), lambda i, k: (i, k), buffers=adj_bufs),  # adj tile
                  s1_spec,                                                 # S1
                  _spec((h_pad, h_pad), lambda i, k: (0, 0), buffers=1),   # W2 resident
                  _spec((1, h_pad), lambda i, k: (0, 0), buffers=1)],      # b1
        out_specs=pl.BlockSpec((tm, h_pad), lambda i, k: (i, 0)),
        scratch_shapes=[pltpu.VMEM((tm, h_pad), jnp.float32)],
        compiler_params=cparams_2d,
    )(adjp, s1, w2, b1)

    # --- stage 3: out = log_softmax((adj @ S2 + b2) @ Wc + bc)  (adj streamed once)
    outp = pl.pallas_call(
        functools.partial(gcn_out_kernel, tk=tk, n_classes=n_classes,
                          s_resident=s_resident),
        out_shape=jax.ShapeDtypeStruct((n_pad, c_pad), jnp.float32),
        grid=(n_rt, n_kt),
        in_specs=[_spec((tm, tk), lambda i, k: (i, k), buffers=adj_bufs),  # adj tile
                  s2_spec,                                                 # S2
                  _spec((h_pad, c_pad), lambda i, k: (0, 0), buffers=1),   # Wc resident
                  _spec((1, h_pad), lambda i, k: (0, 0), buffers=1),       # b2
                  _spec((1, c_pad), lambda i, k: (0, 0), buffers=1)],      # bc
        out_specs=pl.BlockSpec((tm, c_pad), lambda i, k: (i, 0)),          # lane-dense
        scratch_shapes=[pltpu.VMEM((tm, h_pad), jnp.float32)],
        compiler_params=cparams_2d,
    )(adjp, s2, wc, b2, bc)

    # TODO(synk): the f32 (n_pad, 128) output slab is mostly padding for small
    #             n_classes; emit bf16 / compact in an epilogue if downstream allows.
    return outp[:n, :n_classes]


# ---------------------------------------------------------------- reference ----
def reference_forward(x, adj, params):
    h1 = jnp.maximum(adj @ (x @ params["w1"]) + params["b1"], 0.0)
    h2 = adj @ (h1 @ params["w2"]) + params["b2"]
    logits = h2 @ params["wc"] + params["bc"]
    return jax.nn.log_softmax(logits, axis=1)


def init_params(key, input_dim, hidden_dim, n_classes):
    k1, k2, k3 = jax.random.split(key, 3)
    # GraphConvolution weights: (in_features, out_features); biases broadcast as (1, out)
    w1 = jax.random.normal(k1, (input_dim, hidden_dim), jnp.float32) * 0.1
    b1 = jnp.zeros((1, hidden_dim), jnp.float32)
    w2 = jax.random.normal(k2, (hidden_dim, hidden_dim), jnp.float32) * 0.1
    b2 = jnp.zeros((1, hidden_dim), jnp.float32)
    # nn.Linear(hidden, n_classes): torch stores (n_classes, hidden); pre-transposed here
    wc = jax.random.normal(k3, (hidden_dim, n_classes), jnp.float32) * 0.1
    bc = jnp.zeros((1, n_classes), jnp.float32)
    return {"w1": w1, "b1": b1, "w2": w2, "b2": b2, "wc": wc, "bc": bc}


def make_normalized_adj(key, n_nodes):
    """Dense symmetric normalized adjacency with self loops: D^-1/2 (A+I) D^-1/2."""
    a = (jax.random.uniform(key, (n_nodes, n_nodes)) > 0.8).astype(jnp.float32)
    a = jnp.maximum(a, a.T)
    a = a + jnp.eye(n_nodes, dtype=jnp.float32)
    deg = jnp.sum(a, axis=1)
    d_inv_sqrt = 1.0 / jnp.sqrt(deg)
    return a * d_inv_sqrt[:, None] * d_inv_sqrt[None, :]


if __name__ == "__main__":
    N_NODES, INPUT_DIM, HIDDEN_DIM, N_CLASSES = 256, 32, 32, 8

    key = jax.random.PRNGKey(0)
    kx, kadj, kp = jax.random.split(key, 3)

    x = jax.random.normal(kx, (N_NODES, INPUT_DIM), jnp.float32)
    adj = make_normalized_adj(kadj, N_NODES)
    params = init_params(kp, INPUT_DIM, HIDDEN_DIM, N_CLASSES)

    _buffered_ok(1)   # warm the pipeline-mode capability probe eagerly (outside jit)

    forward = jax.jit(node_classifier_forward)
    log_probs = forward(x, adj, params)
    jax.block_until_ready(log_probs)

    assert log_probs.shape == (N_NODES, N_CLASSES)

    # sanity 1: log_softmax rows sum (in prob space) to ~1
    row_sums = jnp.sum(jnp.exp(log_probs), axis=1)
    assert bool(jnp.all(jnp.abs(row_sums - 1.0) < 1e-4))

    # sanity 2: close to the pure-f32 JAX reference (bf16 inputs, f32 accumulation)
    ref = reference_forward(x, adj, params)
    max_err = float(jnp.max(jnp.abs(log_probs - ref)))
    assert max_err < 5e-2, f"max |err| vs f32 reference too large: {max_err}"

    print("KERNEL_OK")
</pallas_src>

<mosaic_0001>
module attributes {stable_mosaic.version = 11 : i64} {
  func.func @_k(%arg0: i32, %arg1: memref<8x128xf32, #tpu.memory_space<vmem>>, %arg2: memref<8x128xf32, #tpu.memory_space<vmem>>) attributes {dimension_semantics = [#tpu.dimension_semantics<arbitrary>], iteration_bounds = array<i64: 4>, scalar_prefetch = 0 : i64, scratch_operands = 0 : i64, tpu.core_type = #tpu.core_type<tc>, window_params = [{pipeline_mode = #tpu.pipeline_mode<synchronous>, transform_indices = @transform_0, window_bounds = array<i64: 8, 128>}, {pipeline_mode = #tpu.pipeline_mode<synchronous>, transform_indices = @transform_1, window_bounds = array<i64: 8, 128>}]} {
    %c0 = arith.constant 0 : index
    %c0_0 = arith.constant 0 : index
    %0 = vector.load %arg1[%c0, %c0_0] : memref<8x128xf32, #tpu.memory_space<vmem>>, vector<8x128xf32>
    %cst = arith.constant 1.000000e+00 : f32
    %1 = vector.broadcast %cst : f32 to vector<8x128xf32>
    %2 = arith.addf %0, %1 : vector<8x128xf32>
    %c0_1 = arith.constant 0 : index
    %c0_2 = arith.constant 0 : index
    %3 = vector.load %arg2[%c0_1, %c0_2] : memref<8x128xf32, #tpu.memory_space<vmem>>, vector<8x128xf32>
    tpu.vector_store %arg2[%c0_1, %c0_2], %2 {strides = array<i32>} : memref<8x128xf32, #tpu.memory_space<vmem>>, vector<8x128xf32>,
    return
  }
  func.func @transform_0(%arg0: i32) -> (i32, i32) {
    %c0_i32 = arith.constant 0 : i32
    %c0_i32_0 = arith.constant 0 : i32
    %c0_i32_1 = arith.constant 0 : i32
    return %c0_i32, %c0_i32_0 : i32, i32
  }
  func.func @transform_1(%arg0: i32) -> (i32, i32) {
    %c0_i32 = arith.constant 0 : i32
    %c0_i32_0 = arith.constant 0 : i32
    %c0_i32_1 = arith.constant 0 : i32
    return %c0_i32, %c0_i32_0 : i32, i32
  }
}

module attributes {stable_mosaic.version = 11 : i64} {
  func.func @gcn_hidden_kernel(%arg0: i32, %arg1: i32, %arg2: memref<128x256xbf16, #tpu.memory_space<vmem>>, %arg3: memref<256x128xbf16, #tpu.memory_space<vmem>>, %arg4: memref<128x128xbf16, #tpu.memory_space<vmem>>, %arg5: memref<1x128xf32, #tpu.memory_space<vmem>>, %arg6: memref<128x128xbf16, #tpu.memory_space<vmem>>, %arg7: memref<128x128xf32, #tpu.memory_space<vmem>>) attributes {dimension_semantics = [#tpu.dimension_semantics<parallel>, #tpu.dimension_semantics<arbitrary>], iteration_bounds = array<i64: 2, 1>, scalar_prefetch = 0 : i64, scratch_operands = 1 : i64, tpu.core_type = #tpu.core_type<tc>, window_params = [{transform_indices = @transform_0, window_bounds = array<i64: 128, 256>}, {pipeline_mode = #tpu.pipeline_mode<synchronous>, transform_indices = @transform_1, window_bounds = array<i64: 256, 128>}, {pipeline_mode = #tpu.pipeline_mode<synchronous>, transform_indices = @transform_2, window_bounds = array<i64: 128, 128>}, {pipeline_mode = #tpu.pipeline_mode<synchronous>, transform_indices = @transform_3, window_bounds = array<i64: 1, 128>}, {transform_indices = @transform_4, window_bounds = array<i64: 128, 128>}]} {
    %c0_i32 = arith.constant 0 : i32
    %0 = arith.cmpi eq, %arg1, %c0_i32 : i32
    %1 = arith.extui %0 : i1 to i32
    %c0_i32_0 = arith.constant 0 : i32
    %2 = arith.cmpi ne, %1, %c0_i32_0 : i32
    scf.if %2 {
      %cst_9 = arith.constant 0.000000e+00 : f32
      %15 = vector.broadcast %cst_9 : f32 to vector<128x128xf32>
      %c0_10 = arith.constant 0 : index
      %c0_11 = arith.constant 0 : index
      %16 = vector.load %arg7[%c0_10, %c0_11] : memref<128x128xf32, #tpu.memory_space<vmem>>, vector<128x128xf32>
      tpu.vector_store %arg7[%c0_10, %c0_11], %15 {strides = array<i32>} : memref<128x128xf32, #tpu.memory_space<vmem>>, vector<128x128xf32>,
    } else {
    }
    %c256_i32 = arith.constant 256 : i32
    %3 = arith.muli %arg1, %c256_i32 : i32
    %4 = tpu.assume_multiple %3, 256 : i32
    %5 = arith.index_cast %4 : i32 to index
    %c0 = arith.constant 0 : index
    %6 = vector.load %arg3[%5, %c0] : memref<256x128xbf16, #tpu.memory_space<vmem>>, vector<256x128xbf16>
    %c0_1 = arith.constant 0 : index
    %c0_2 = arith.constant 0 : index
    %7 = vector.load %arg7[%c0_1, %c0_2] : memref<128x128xf32, #tpu.memory_space<vmem>>, vector<128x128xf32>
    %c0_3 = arith.constant 0 : index
    %c0_4 = arith.constant 0 : index
    %8 = vector.load %arg2[%c0_3, %c0_4] : memref<128x256xbf16, #tpu.memory_space<vmem>>, vector<128x256xbf16>
    %cst = arith.constant dense<0.000000e+00> : vector<128x128xf32>
    %9 = tpu.matmul %8, %6, %cst {dimension_numbers = #tpu.dot_dimension_numbers<[1], [0], [0], [1], [0, 0, 1, 1], [], []>} : vector<128x256xbf16>, vector<256x128xbf16>, vector<128x128xf32> -> vector<128x128xf32>
    %10 = arith.addf %7, %9 : vector<128x128xf32>
    %c0_5 = arith.constant 0 : index
    %c0_6 = arith.constant 0 : index
    %11 = vector.load %arg7[%c0_5, %c0_6] : memref<128x128xf32, #tpu.memory_space<vmem>>, vector<128x128xf32>
    tpu.vector_store %arg7[%c0_5, %c0_6], %10 {strides = array<i32>} : memref<128x128xf32, #tpu.memory_space<vmem>>, vector<128x128xf32>,
    %c0_i32_7 = arith.constant 0 : i32
    %12 = arith.cmpi eq, %arg1, %c0_i32_7 : i32
    %13 = arith.extui %12 : i1 to i32
    %c0_i32_8 = arith.constant 0 : i32
    %14 = arith.cmpi ne, %13, %c0_i32_8 : i32
    scf.if %14 {
      %c0_9 = arith.constant 0 : index
      %c0_10 = arith.constant 0 : index
      %15 = vector.load %arg7[%c0_9, %c0_10] : memref<128x128xf32, #tpu.memory_space<vmem>>, vector<128x128xf32>
      %c0_11 = arith.constant 0 : index
      %c0_12 = arith.constant 0 : index
      %16 = vector.load %arg5[%c0_11, %c0_12] : memref<1x128xf32, #tpu.memory_space<vmem>>, vector<1x128xf32>
      %17 = vector.broadcast %16 : vector<1x128xf32> to vector<128x128xf32>
      %18 = arith.addf %15, %17 : vector<128x128xf32>
      %cst_13 = arith.constant 0.000000e+00 : f32
      %19 = vector.broadcast %cst_13 : f32 to vector<128x128xf32>
      %20 = arith.maximumf %18, %19 : vector<128x128xf32>
      %21 = arith.truncf %20 : vector<128x128xf32> to vector<128x128xbf16>
      %c0_14 = arith.constant 0 : index
      %c0_15 = arith.constant 0 : index
      %22 = vector.load %arg4[%c0_14, %c0_15] : memref<128x128xbf16, #tpu.memory_space<vmem>>, vector<128x128xbf16>
      %cst_16 = arith.constant dense<0.000000e+00> : vector<128x128xf32>
      %23 = tpu.matmul %21, %22, %cst_16 {dimension_numbers = #tpu.dot_dimension_numbers<[1], [0], [0], [1], [0, 0, 1, 1], [], []>} : vector<128x128xbf16>, vector<128x128xbf16>, vector<128x128xf32> -> vector<128x128xf32>
      %24 = arith.truncf %23 : vector<128x128xf32> to vector<128x128xbf16>
      %c0_17 = arith.constant 0 : index
      %c0_18 = arith.constant 0 : index
      %25 = vector.load %arg6[%c0_17, %c0_18] : memref<128x128xbf16, #tpu.memory_space<vmem>>, vector<128x128xbf16>
      tpu.vector_store %arg6[%c0_17, %c0_18], %24 {strides = array<i32>} : memref<128x128xbf16, #tpu.memory_space<vmem>>, vector<128x128xbf16>,
    } else {
    }
    return
  }
  func.func @transform_0(%arg0: i32, %arg1: i32) -> (i32, i32) {
    %c0_i32 = arith.constant 0 : i32
    return %arg0, %arg1 : i32, i32
  }
  func.func @transform_1(%arg0: i32, %arg1: i32) -> (i32, i32) {
    %c0_i32 = arith.constant 0 : i32
    %c0_i32_0 = arith.constant 0 : i32
    %c0_i32_1 = arith.constant 0 : i32
    return %c0_i32, %c0_i32_0 : i32, i32
  }
  func.func @transform_2(%arg0: i32, %arg1: i32) -> (i32, i32) {
    %c0_i32 = arith.constant 0 : i32
    %c0_i32_0 = arith.constant 0 : i32
    %c0_i32_1 = arith.constant 0 : i32
    return %c0_i32, %c0_i32_0 : i32, i32
  }
  func.func @transform_3(%arg0: i32, %arg1: i32) -> (i32, i32) {
    %c0_i32 = arith.constant 0 : i32
    %c0_i32_0 = arith.constant 0 : i32
    %c0_i32_1 = arith.constant 0 : i32
    return %c0_i32, %c0_i32_0 : i32, i32
  }
  func.func @transform_4(%arg0: i32, %arg1: i32) -> (i32, i32) {
    %c0_i32 = arith.constant 0 : i32
    %c0_i32_0 = arith.constant 0 : i32
    return %arg0, %c0_i32 : i32, i32
  }
}

module attributes {stable_mosaic.version = 11 : i64} {
  func.func @feat_kernel(%arg0: i32, %arg1: memref<128x128xbf16, #tpu.memory_space<vmem>>, %arg2: memref<128x128xbf16, #tpu.memory_space<vmem>>, %arg3: memref<128x128xbf16, #tpu.memory_space<vmem>>) attributes {dimension_semantics = [#tpu.dimension_semantics<parallel>], iteration_bounds = array<i64: 2>, scalar_prefetch = 0 : i64, scratch_operands = 0 : i64, tpu.core_type = #tpu.core_type<tc>, window_params = [{transform_indices = @transform_0, window_bounds = array<i64: 128, 128>}, {pipeline_mode = #tpu.pipeline_mode<synchronous>, transform_indices = @transform_1, window_bounds = array<i64: 128, 128>}, {transform_indices = @transform_2, window_bounds = array<i64: 128, 128>}]} {
    %c0 = arith.constant 0 : index
    %c0_0 = arith.constant 0 : index
    %0 = vector.load %arg1[%c0, %c0_0] : memref<128x128xbf16, #tpu.memory_space<vmem>>, vector<128x128xbf16>
    %c0_1 = arith.constant 0 : index
    %c0_2 = arith.constant 0 : index
    %1 = vector.load %arg2[%c0_1, %c0_2] : memref<128x128xbf16, #tpu.memory_space<vmem>>, vector<128x128xbf16>
    %cst = arith.constant dense<0.000000e+00> : vector<128x128xf32>
    %2 = tpu.matmul %0, %1, %cst {dimension_numbers = #tpu.dot_dimension_numbers<[1], [0], [0], [1], [0, 0, 1, 1], [], []>} : vector<128x128xbf16>, vector<128x128xbf16>, vector<128x128xf32> -> vector<128x128xf32>
    %3 = arith.truncf %2 : vector<128x128xf32> to vector<128x128xbf16>
    %c0_3 = arith.constant 0 : index
    %c0_4 = arith.constant 0 : index
    %4 = vector.load %arg3[%c0_3, %c0_4] : memref<128x128xbf16, #tpu.memory_space<vmem>>, vector<128x128xbf16>
    tpu.vector_store %arg3[%c0_3, %c0_4], %3 {strides = array<i32>} : memref<128x128xbf16, #tpu.memory_space<vmem>>, vector<128x128xbf16>,
    return
  }
  func.func @transform_0(%arg0: i32) -> (i32, i32) {
    %c0_i32 = arith.constant 0 : i32
    %c0_i32_0 = arith.constant 0 : i32
    return %arg0, %c0_i32 : i32, i32
  }
  func.func @transform_1(%arg0: i32) -> (i32, i32) {
    %c0_i32 = arith.constant 0 : i32
    %c0_i32_0 = arith.constant 0 : i32
    %c0_i32_1 = arith.constant 0 : i32
    return %c0_i32, %c0_i32_0 : i32, i32
  }
  func.func @transform_2(%arg0: i32) -> (i32, i32) {
    %c0_i32 = arith.constant 0 : i32
    %c0_i32_0 = arith.constant 0 : i32
    return %arg0, %c0_i32 : i32, i32
  }
}

module attributes {stable_mosaic.version = 11 : i64} {
  func.func @gcn_out_kernel(%arg0: i32, %arg1: i32, %arg2: memref<128x256xbf16, #tpu.memory_space<vmem>>, %arg3: memref<256x128xbf16, #tpu.memory_space<vmem>>, %arg4: memref<128x128xbf16, #tpu.memory_space<vmem>>, %arg5: memref<1x128xf32, #tpu.memory_space<vmem>>, %arg6: memref<1x128xf32, #tpu.memory_space<vmem>>, %arg7: memref<128x128xf32, #tpu.memory_space<vmem>>, %arg8: memref<128x128xf32, #tpu.memory_space<vmem>>) attributes {dimension_semantics = [#tpu.dimension_semantics<parallel>, #tpu.dimension_semantics<arbitrary>], iteration_bounds = array<i64: 2, 1>, scalar_prefetch = 0 : i64, scratch_operands = 1 : i64, tpu.core_type = #tpu.core_type<tc>, window_params = [{transform_indices = @transform_0, window_bounds = array<i64: 128, 256>}, {pipeline_mode = #tpu.pipeline_mode<synchronous>, transform_indices = @transform_1, window_bounds = array<i64: 256, 128>}, {pipeline_mode = #tpu.pipeline_mode<synchronous>, transform_indices = @transform_2, window_bounds = array<i64: 128, 128>}, {pipeline_mode = #tpu.pipeline_mode<synchronous>, transform_indices = @transform_3, window_bounds = array<i64: 1, 128>}, {pipeline_mode = #tpu.pipeline_mode<synchronous>, transform_indices = @transform_4, window_bounds = array<i64: 1, 128>}, {transform_indices = @transform_5, window_bounds = array<i64: 128, 128>}]} {
    %c0_i32 = arith.constant 0 : i32
    %0 = arith.cmpi eq, %arg1, %c0_i32 : i32
    %1 = arith.extui %0 : i1 to i32
    %c0_i32_0 = arith.constant 0 : i32
    %2 = arith.cmpi ne, %1, %c0_i32_0 : i32
    scf.if %2 {
      %cst_9 = arith.constant 0.000000e+00 : f32
      %15 = vector.broadcast %cst_9 : f32 to vector<128x128xf32>
      %c0_10 = arith.constant 0 : index
      %c0_11 = arith.constant 0 : index
      %16 = vector.load %arg8[%c0_10, %c0_11] : memref<128x128xf32, #tpu.memory_space<vmem>>, vector<128x128xf32>
      tpu.vector_store %arg8[%c0_10, %c0_11], %15 {strides = array<i32>} : memref<128x128xf32, #tpu.memory_space<vmem>>, vector<128x128xf32>,
    } else {
    }
    %c256_i32 = arith.constant 256 : i32
    %3 = arith.muli %arg1, %c256_i32 : i32
    %4 = tpu.assume_multiple %3, 256 : i32
    %5 = arith.index_cast %4 : i32 to index
    %c0 = arith.constant 0 : index
    %6 = vector.load %arg3[%5, %c0] : memref<256x128xbf16, #tpu.memory_space<vmem>>, vector<256x128xbf16>
    %c0_1 = arith.constant 0 : index
    %c0_2 = arith.constant 0 : index
    %7 = vector.load %arg8[%c0_1, %c0_2] : memref<128x128xf32, #tpu.memory_space<vmem>>, vector<128x128xf32>
    %c0_3 = arith.constant 0 : index
    %c0_4 = arith.constant 0 : index
    %8 = vector.load %arg2[%c0_3, %c0_4] : memref<128x256xbf16, #tpu.memory_space<vmem>>, vector<128x256xbf16>
    %cst = arith.constant dense<0.000000e+00> : vector<128x128xf32>
    %9 = tpu.matmul %8, %6, %cst {dimension_numbers = #tpu.dot_dimension_numbers<[1], [0], [0], [1], [0, 0, 1, 1], [], []>} : vector<128x256xbf16>, vector<256x128xbf16>, vector<128x128xf32> -> vector<128x128xf32>
    %10 = arith.addf %7, %9 : vector<128x128xf32>
    %c0_5 = arith.constant 0 : index
    %c0_6 = arith.constant 0 : index
    %11 = vector.load %arg8[%c0_5, %c0_6] : memref<128x128xf32, #tpu.memory_space<vmem>>, vector<128x128xf32>
    tpu.vector_store %arg8[%c0_5, %c0_6], %10 {strides = array<i32>} : memref<128x128xf32, #tpu.memory_space<vmem>>, vector<128x128xf32>,
    %c0_i32_7 = arith.constant 0 : i32
    %12 = arith.cmpi eq, %arg1, %c0_i32_7 : i32
    %13 = arith.extui %12 : i1 to i32
    %c0_i32_8 = arith.constant 0 : i32
    %14 = arith.cmpi ne, %13, %c0_i32_8 : i32
    scf.if %14 {
      %c0_9 = arith.constant 0 : index
      %c0_10 = arith.constant 0 : index
      %15 = vector.load %arg8[%c0_9, %c0_10] : memref<128x128xf32, #tpu.memory_space<vmem>>, vector<128x128xf32>
      %c0_11 = arith.constant 0 : index
      %c0_12 = arith.constant 0 : index
      %16 = vector.load %arg5[%c0_11, %c0_12] : memref<1x128xf32, #tpu.memory_space<vmem>>, vector<1x128xf32>
      %17 = vector.broadcast %16 : vector<1x128xf32> to vector<128x128xf32>
      %18 = arith.addf %15, %17 : vector<128x128xf32>
      %19 = arith.truncf %18 : vector<128x128xf32> to vector<128x128xbf16>
      %c0_13 = arith.constant 0 : index
      %c0_14 = arith.constant 0 : index
      %20 = vector.load %arg4[%c0_13, %c0_14] : memref<128x128xbf16, #tpu.memory_space<vmem>>, vector<128x128xbf16>
      %cst_15 = arith.constant dense<0.000000e+00> : vector<128x128xf32>
      %21 = tpu.matmul %19, %20, %cst_15 {dimension_numbers = #tpu.dot_dimension_numbers<[1], [0], [0], [1], [0, 0, 1, 1], [], []>} : vector<128x128xbf16>, vector<128x128xbf16>, vector<128x128xf32> -> vector<128x128xf32>
      %c0_16 = arith.constant 0 : index
      %c0_17 = arith.constant 0 : index
      %22 = vector.load %arg6[%c0_16, %c0_17] : memref<1x128xf32, #tpu.memory_space<vmem>>, vector<1x128xf32>
      %23 = vector.broadcast %22 : vector<1x128xf32> to vector<128x128xf32>
      %24 = arith.addf %21, %23 : vector<128x128xf32>
      %25 = tpu.iota {dimensions = array<i32: 1>} : vector<128x128xi32>
      %c8_i32 = arith.constant 8 : i32
      %26 = vector.broadcast %c8_i32 : i32 to vector<128x128xi32>
      %27 = arith.cmpi slt, %25, %26 : vector<128x128xi32>
      %cst_18 = arith.constant -1.000000e+30 : f32
      %28 = vector.broadcast %cst_18 : f32 to vector<128x128xf32>
      %29 = arith.select %27, %24, %28 : vector<128x128xi1>, vector<128x128xf32>
      %cst_19 = arith.constant dense<0xFF800000> : vector<128xf32>
      %30 = vector.multi_reduction <maximumf>, %29, %cst_19 [1] : vector<128x128xf32> to vector<128xf32>
      %31 = vector.shape_cast %30 : vector<128xf32> to vector<128x1xf32>
      %32 = vector.broadcast %31 : vector<128x1xf32> to vector<128x128xf32>
      %33 = arith.subf %29, %32 : vector<128x128xf32>
      %34 = math.exp %33 : vector<128x128xf32>
      %cst_20 = arith.constant 0.000000e+00 : f32
      %35 = vector.broadcast %cst_20 : f32 to vector<128x128xf32>
      %36 = arith.select %27, %34, %35 : vector<128x128xi1>, vector<128x128xf32>
      %cst_21 = arith.constant dense<0.000000e+00> : vector<128xf32>
      %37 = vector.multi_reduction <add>, %36, %cst_21 [1] : vector<128x128xf32> to vector<128xf32>
      %38 = vector.shape_cast %37 : vector<128xf32> to vector<128x1xf32>
      %39 = math.log %38 : vector<128x1xf32>
      %40 = vector.broadcast %39 : vector<128x1xf32> to vector<128x128xf32>
      %41 = arith.subf %33, %40 : vector<128x128xf32>
      %c0_22 = arith.constant 0 : index
      %c0_23 = arith.constant 0 : index
      %42 = vector.load %arg7[%c0_22, %c0_23] : memref<128x128xf32, #tpu.memory_space<vmem>>, vector<128x128xf32>
      tpu.vector_store %arg7[%c0_22, %c0_23], %41 {strides = array<i32>} : memref<128x128xf32, #tpu.memory_space<vmem>>, vector<128x128xf32>,
    } else {
    }
    return
  }
  func.func @transform_0(%arg0: i32, %arg1: i32) -> (i32, i32) {
    %c0_i32 = arith.constant 0 : i32
    return %arg0, %arg1 : i32, i32
  }
  func.func @transform_1(%arg0: i32, %arg1: i32) -> (i32, i32) {
    %c0_i32 = arith.constant 0 : i32
    %c0_i32_0 = arith.constant 0 : i32
    %c0_i32_1 = arith.constant 0 : i32
    return %c0_i32, %c0_i32_0 : i32, i32
  }
  func.func @transform_2(%arg0: i32, %arg1: i32) -> (i32, i32) {
    %c0_i32 = arith.constant 0 : i32
    %c0_i32_0 = arith.constant 0 : i32
    %c0_i32_1 = arith.constant 0 : i32
    return %c0_i32, %c0_i32_0 : i32, i32
  }
  func.func @transform_3(%arg0: i32, %arg1: i32) -> (i32, i32) {
    %c0_i32 = arith.constant 0 : i32
    %c0_i32_0 = arith.constant 0 : i32
    %c0_i32_1 = arith.constant 0 : i32
    return %c0_i32, %c0_i32_0 : i32, i32
  }
  func.func @transform_4(%arg0: i32, %arg1: i32) -> (i32, i32) {
    %c0_i32 = arith.constant 0 : i32
    %c0_i32_0 = arith.constant 0 : i32
    %c0_i32_1 = arith.constant 0 : i32
    return %c0_i32, %c0_i32_0 : i32, i32
  }
  func.func @transform_5(%arg0: i32, %arg1: i32) -> (i32, i32) {
    %c0_i32 = arith.constant 0 : i32
    %c0_i32_0 = arith.constant 0 : i32
    return %arg0, %c0_i32 : i32, i32
  }
}

</mosaic_0001>

<llo_original>
// kernel: tpu_custom_call.1
$region0: #{tpu_custom_call.1}
  #allocation0 [shape = 'u32[]', space=smem, size = 0x4, offset = 0x4, fixed_abs, tag = 'smem constant byte address 0x4 - core index']
  #allocation1 [shape = 'u32[144,128]{1,0:T(1,128)}', space=vmem, size = 0x12000, scoped, tag = 'internal scratch']
  %s0 = inlined_call_operand.hbm [shape: f32[8,128], index: 0, kind: input, shape index: {}]
  %s1 = inlined_call_operand.hbm [shape: f32[8,128], index: 1, kind: output, shape index: {}]
  %s2 = sld [smem:[#allocation0]]
  $region41: #{tpu_custom_call.1} parent=0
    _
  %s4 = ssub.s32 1, %s2
  %s5 = scalar_select 0, %s4, %s2
  $region1: #{tpu_custom_call.1} parent=0
    #allocation2 [shape = 'u8[4096]{0}', space=vmem, size = 0x1000, scoped, tag = 'input window, operand 0, single buffered']
    #allocation3 [shape = 's32[2]{0}', space=sflag, size = 0x8, scoped, tag = 'scoped memory for tpu_custom_call.1']
    #allocation4 [shape = 's32[2]{0}', space=sflag, size = 0x8, scoped, tag = 'scoped memory for tpu_custom_call.1']
    #allocation5 [shape = 'u8[4096]{0}', space=vmem, size = 0x1000, scoped, tag = 'output window, operand 0, single buffered']
    %6 = vsyncpa [#allocation3], 0
    %7 = vsyncpa [#allocation4], 0
    loop: start=0, step=1, limit=6
    $region2: #{tpu_custom_call.1} parent=1 // loop_pre_header
      _
    $region3: #{tpu_custom_call.1} parent=1 // loop_header
      %s9 = sphi 0, %s13
      %p10 = scmp.ge.s32.totalorder %s9, 6
      %s17 = sphi 0, %s17
      %s19 = sphi 0, %s17
      %s20 = sphi 0, %s19
      %s34 = sphi 0, %s20
      %s38 = sphi 0, %s38
      %s40 = sphi 0, %s38
      %s41 = sphi 0, %s40
      %s55 = sphi 0, %s41
    $region4: #{tpu_custom_call.1} parent=1 // loop_header_branch
      %12 = sbr.rel (%p10) target = $region8
    $region5: #{tpu_custom_call.1} parent=1 // loop_body
      %s14 = ssub.s32 %s9, 1
      %s15 = ssub.s32 %s9, 2
      %s16 = sadd.s32 %s9, 1
      %s18 = sadd.s32 %s17, 1
      %p21 = scmp.eq.s32.totalorder %s9, 3
      %p22 = scmp.ne.s32.totalorder %s17, %s19
      %p23 = scmp.eq.s32.totalorder %s9, 0
      %p24 = por %p22, %p23
      %p25 = scmp.ne.s32.totalorder %s17, %s19
      %p26 = scmp.eq.s32.totalorder %s14, 3
      %p27 = por %p25, %p26
      %p28 = scmp.ne.s32.totalorder %s19, %s20
      %p29 = scmp.eq.s32.totalorder %s14, 0
      %p30 = por %p28, %p29
      %p31 = scmp.ne.s32.totalorder %s19, %s20
      %p32 = scmp.eq.s32.totalorder %s15, 3
      %p33 = por %p31, %p32
      %p35 = scmp.ne.s32.totalorder %s20, %s34
      %p36 = scmp.eq.s32.totalorder %s15, 0
      %p37 = por %p35, %p36
      %s39 = sadd.s32 %s38, 1
      %p42 = scmp.eq.s32.totalorder %s9, 3
      %p43 = scmp.ne.s32.totalorder %s38, %s40
      %p44 = scmp.eq.s32.totalorder %s9, 0
      %p45 = por %p43, %p44
      %p46 = scmp.ne.s32.totalorder %s38, %s40
      %p47 = scmp.eq.s32.totalorder %s14, 3
      %p48 = por %p46, %p47
      %p49 = scmp.ne.s32.totalorder %s40, %s41
      %p50 = scmp.eq.s32.totalorder %s14, 0
      %p51 = por %p49, %p50
      %p52 = scmp.ne.s32.totalorder %s40, %s41
      %p53 = scmp.eq.s32.totalorder %s15, 3
      %p54 = por %p52, %p53
      %p56 = scmp.ne.s32.totalorder %s41, %s55
      %p57 = scmp.eq.s32.totalorder %s15, 0
      %p58 = por %p56, %p57
      %p59 = scmp.le.s32.totalorder 1, %s9
      %p60 = scmp.lt.s32.totalorder %s9, 5
      %p61 = pnand %p59, %p60
      %p62 = pneg %p61
      // Predicated region
      $region9: #{tpu_custom_call.1} parent=5 // pred_check
        _
      $region10: #{tpu_custom_call.1} parent=5 // pred_check_branch
        %64 = sbr.rel (%p61) target = $region12
      $region11: #{tpu_custom_call.1} parent=5 // pred_region
        %s65 = ssub.s32 %s9, 1
        // Predicated region
        $region13: #{tpu_custom_call.1} parent=11 // pred_check
          %p66 = pneg %p30
        $region14: #{tpu_custom_call.1} parent=11 // pred_check_branch
          %68 = sbr.rel (%p66) target = $region16
        $region15: #{tpu_custom_call.1} parent=11 // pred_region
          %s70 = ssub.s32 128, 128
          %71 = vsyncadd [#allocation3], %s70
          %s73 = sshll.u32 [#allocation2], 4
          %s74 = int_to_ptr.vmem [resolvable:$true] %s73
          %76 = dma.hbm_to_vmem [thread:$0]  %s0, 128, %s74, [#allocation3]
        $region16: #{tpu_custom_call.1} parent=11 // pred_fallthru
          _
      $region12: #{tpu_custom_call.1} parent=5 // pred_fallthru
        _
      %p77 = scmp.lt.s32.totalorder %s9, 4
      // Predicated region
      $region17: #{tpu_custom_call.1} parent=5 // pred_check
        %p78 = pneg %p77
      $region18: #{tpu_custom_call.1} parent=5 // pred_check_branch
        %80 = sbr.rel (%p78) target = $region20
      $region19: #{tpu_custom_call.1} parent=5 // pred_region
        _
      $region20: #{tpu_custom_call.1} parent=5 // pred_fallthru
        _
      %p81 = scmp.le.s32.totalorder 1, %s9
      %p82 = scmp.lt.s32.totalorder %s9, 5
      %p83 = pnand %p81, %p82
      %p84 = pneg %p83
      // Predicated region
      $region21: #{tpu_custom_call.1} parent=5 // pred_check
        _
      $region22: #{tpu_custom_call.1} parent=5 // pred_check_branch
        %86 = sbr.rel (%p83) target = $region24
      $region23: #{tpu_custom_call.1} parent=5 // pred_region
        %s87 = ssub.s32 %s9, 1
        // Predicated region
        $region25: #{tpu_custom_call.1} parent=23 // pred_check
          %p88 = pneg %p30
        $region26: #{tpu_custom_call.1} parent=23 // pred_check_branch
          %90 = sbr.rel (%p88) target = $region28
        $region27: #{tpu_custom_call.1} parent=23 // pred_region
          %91 = dma.done [#allocation3], 128
        $region28: #{tpu_custom_call.1} parent=23 // pred_fallthru
          _
        %p92 = pneg %p30
        %p93 = pneg %p27
        %p94 = pneg %p51
        %p95 = pneg %p48
        %v96 = vld [vmem:[#allocation2] sm:$0xff]
        %v97 = vadd.f32 %v96, 1.0
        %98 = vst [vmem:[#allocation5] sm:$0xff] %v97
        // Predicated region
        $region29: #{tpu_custom_call.1} parent=23 // pred_check
          %p99 = pneg %p48
        $region30: #{tpu_custom_call.1} parent=23 // pred_check_branch
          %101 = sbr.rel (%p99) target = $region32
        $region31: #{tpu_custom_call.1} parent=23 // pred_region
          %s103 = ssub.s32 128, 128
          %104 = vsyncadd [#allocation4], %s103
          %s106 = sshll.u32 [#allocation5], 4
          %s107 = int_to_ptr.vmem [resolvable:$true] %s106
          %109 = dma.vmem_to_hbm [thread:$0]  %s107, 128, %s1, [#allocation4]
        $region32: #{tpu_custom_call.1} parent=23 // pred_fallthru
          _
        // Predicated region
        $region33: #{tpu_custom_call.1} parent=23 // pred_check
          %p110 = pneg %p48
        $region34: #{tpu_custom_call.1} parent=23 // pred_check_branch
          %112 = sbr.rel (%p110) target = $region36
        $region35: #{tpu_custom_call.1} parent=23 // pred_region
          %113 = dma.done [#allocation4], 128
        $region36: #{tpu_custom_call.1} parent=23 // pred_fallthru
          _
      $region24: #{tpu_custom_call.1} parent=5 // pred_fallthru
        _
      %p114 = scmp.le.s32.totalorder 2, %s9
      // Predicated region
      $region37: #{tpu_custom_call.1} parent=5 // pred_check
        %p115 = pneg %p114
      $region38: #{tpu_custom_call.1} parent=5 // pred_check_branch
        %117 = sbr.rel (%p115) target = $region40
      $region39: #{tpu_custom_call.1} parent=5 // pred_region
        %s118 = ssub.s32 %s9, 2
      $region40: #{tpu_custom_call.1} parent=5 // pred_fallthru
        _
    $region6: #{tpu_custom_call.1} parent=1 // loop_footer
      %s13 = sadd.s32 1, %s9
    $region7: #{tpu_custom_call.1} parent=1 // loop_footer_branch
      %8 = sbr.rel target = $region3
    $region8: #{tpu_custom_call.1} parent=1 // loop_exit
      _
    %119 = vsyncpa [#allocation3], 1
    %s120 = scalar_lea.sflag [#allocation3], 1
    %121 = vsyncpa %s120, 1
    %122 = vsyncpa [#allocation4], 1
    %s123 = scalar_lea.sflag [#allocation4], 1
    %124 = vsyncpa %s123, 1

// kernel: node_classifier_forward.3
$region0: #{node_classifier_forward.3}
  #allocation0 [shape = 'u32[]', space=smem, size = 0x4, offset = 0x4, fixed_abs, tag = 'smem constant byte address 0x4 - core index']
  #allocation1 [shape = 'u32[144,128]{1,0:T(1,128)}', space=vmem, size = 0x12000, scoped, tag = 'internal scratch']
  %s0 = inlined_call_operand.vmem [shape: bf16[256,128], index: 0, kind: input, shape index: {}]
  %s1 = inlined_call_operand.vmem [shape: bf16[128,128], index: 1, kind: input, shape index: {}]
  %s2 = inlined_call_operand.vmem [shape: bf16[256,128], index: 2, kind: output, shape index: {}]
  %s3 = sld [smem:[#allocation0]]
  $region41: #{node_classifier_forward.3} parent=0
    _
  %s5 = ssub.s32 1, %s3
  %s6 = scalar_select 0, %s5, %s3
  loop: start=0, step=1, limit=4
  $region2: #{node_classifier_forward.3} parent=0 // loop_pre_header
    _
  $region3: #{node_classifier_forward.3} parent=0 // loop_header
    %s8 = sphi 0, %s12
    %p9 = scmp.ge.s32.totalorder %s8, 4
    %s18 = sphi 0, %s20
    %s21 = sphi 0, %s18
    %s22 = sphi 0, %s21
    %s38 = sphi 0, %s22
    %s42 = sphi 0, %s42
    %s44 = sphi 0, %s42
    %s45 = sphi 0, %s44
    %s59 = sphi 0, %s45
    %s65 = sphi 0, %s67
    %s68 = sphi 0, %s65
    %s69 = sphi 0, %s68
    %s85 = sphi 0, %s69
  $region4: #{node_classifier_forward.3} parent=0 // loop_header_branch
    %11 = sbr.rel (%p9) target = $region8
  $region5: #{node_classifier_forward.3} parent=0 // loop_body
    %s13 = ssub.s32 %s8, 1
    %s14 = ssub.s32 %s8, 2
    %s15 = sadd.s32 %s8, 1
    %s16 = ssub.s32 %s8, %s15
    %p17 = scmp.eq.s32.totalorder %s16, 0
    %s19 = sadd.s32 %s18, 1
    %s20 = scalar_select %p17, %s18, %s19
    %p23 = pneg %p17
    %p24 = scmp.eq.s32.totalorder %s8, 1
    %p25 = por %p23, %p24
    %p26 = scmp.ne.s32.totalorder %s18, %s21
    %p27 = scmp.eq.s32.totalorder %s8, 0
    %p28 = por %p26, %p27
    %p29 = scmp.ne.s32.totalorder %s18, %s21
    %p30 = scmp.eq.s32.totalorder %s13, 1
    %p31 = por %p29, %p30
    %p32 = scmp.ne.s32.totalorder %s21, %s22
    %p33 = scmp.eq.s32.totalorder %s13, 0
    %p34 = por %p32, %p33
    %p35 = scmp.ne.s32.totalorder %s21, %s22
    %p36 = scmp.eq.s32.totalorder %s14, 1
    %p37 = por %p35, %p36
    %p39 = scmp.ne.s32.totalorder %s22, %s38
    %p40 = scmp.eq.s32.totalorder %s14, 0
    %p41 = por %p39, %p40
    %s43 = sadd.s32 %s42, 1
    %p46 = scmp.eq.s32.totalorder %s8, 1
    %p47 = scmp.ne.s32.totalorder %s42, %s44
    %p48 = scmp.eq.s32.totalorder %s8, 0
    %p49 = por %p47, %p48
    %p50 = scmp.ne.s32.totalorder %s42, %s44
    %p51 = scmp.eq.s32.totalorder %s13, 1
    %p52 = por %p50, %p51
    %p53 = scmp.ne.s32.totalorder %s44, %s45
    %p54 = scmp.eq.s32.totalorder %s13, 0
    %p55 = por %p53, %p54
    %p56 = scmp.ne.s32.totalorder %s44, %s45
    %p57 = scmp.eq.s32.totalorder %s14, 1
    %p58 = por %p56, %p57
    %p60 = scmp.ne.s32.totalorder %s45, %s59
    %p61 = scmp.eq.s32.totalorder %s14, 0
    %p62 = por %p60, %p61
    %s63 = ssub.s32 %s8, %s15
    %p64 = scmp.eq.s32.totalorder %s63, 0
    %s66 = sadd.s32 %s65, 1
    %s67 = scalar_select %p64, %s65, %s66
    %p70 = pneg %p64
    %p71 = scmp.eq.s32.totalorder %s8, 1
    %p72 = por %p70, %p71
    %p73 = scmp.ne.s32.totalorder %s65, %s68
    %p74 = scmp.eq.s32.totalorder %s8, 0
    %p75 = por %p73, %p74
    %p76 = scmp.ne.s32.totalorder %s65, %s68
    %p77 = scmp.eq.s32.totalorder %s13, 1
    %p78 = por %p76, %p77
    %p79 = scmp.ne.s32.totalorder %s68, %s69
    %p80 = scmp.eq.s32.totalorder %s13, 0
    %p81 = por %p79, %p80
    %p82 = scmp.ne.s32.totalorder %s68, %s69
    %p83 = scmp.eq.s32.totalorder %s14, 1
    %p84 = por %p82, %p83
    %p86 = scmp.ne.s32.totalorder %s69, %s85
    %p87 = scmp.eq.s32.totalorder %s14, 0
    %p88 = por %p86, %p87
    %p89 = scmp.le.s32.totalorder 1, %s8
    %p90 = scmp.lt.s32.totalorder %s8, 3
    %p91 = pnand %p89, %p90
    %p92 = pneg %p91
    // Predicated region
    $region9: #{node_classifier_forward.3} parent=5 // pred_check
      _
    $region10: #{node_classifier_forward.3} parent=5 // pred_check_branch
      %94 = sbr.rel (%p91) target = $region12
    $region11: #{node_classifier_forward.3} parent=5 // pred_region
      %s95 = ssub.s32 %s8, 1
      // Predicated region
      $region13: #{node_classifier_forward.3} parent=11 // pred_check
        %p96 = pneg %p55
      $region14: #{node_classifier_forward.3} parent=11 // pred_check_branch
        %98 = sbr.rel (%p96) target = $region16
      $region15: #{node_classifier_forward.3} parent=11 // pred_region
        _
      $region16: #{node_classifier_forward.3} parent=11 // pred_fallthru
        _
    $region12: #{node_classifier_forward.3} parent=5 // pred_fallthru
      _
    %p99 = scmp.lt.s32.totalorder %s8, 2
    // Predicated region
    $region17: #{node_classifier_forward.3} parent=5 // pred_check
      %p100 = pneg %p99
    $region18: #{node_classifier_forward.3} parent=5 // pred_check_branch
      %102 = sbr.rel (%p100) target = $region20
    $region19: #{node_classifier_forward.3} parent=5 // pred_region
      // Predicated region
      $region21: #{node_classifier_forward.3} parent=19 // pred_check
        %p103 = pneg %p28
      $region22: #{node_classifier_forward.3} parent=19 // pred_check_branch
        %105 = sbr.rel (%p103) target = $region24
      $region23: #{node_classifier_forward.3} parent=19 // pred_region
        %s106 = smul.u32 16, %s8
        %p107 = scmp.lt.s32.totalorder %s106, 31
        %s108 = scalar_select %p107, %s106, 31
        %s109 = smul.addr %s108, 4
        %s110 = scalar_lea.vmem %s0, %s109
        %s111 = smul.u32 16, %s8
      $region24: #{node_classifier_forward.3} parent=19 // pred_fallthru
        _
    $region20: #{node_classifier_forward.3} parent=5 // pred_fallthru
      _
    %p112 = scmp.le.s32.totalorder 1, %s8
    %p113 = scmp.lt.s32.totalorder %s8, 3
    %p114 = pnand %p112, %p113
    %p115 = pneg %p114
    // Predicated region
    $region25: #{node_classifier_forward.3} parent=5 // pred_check
      _
    $region26: #{node_classifier_forward.3} parent=5 // pred_check_branch
      %117 = sbr.rel (%p114) target = $region28
    $region27: #{node_classifier_forward.3} parent=5 // pred_region
      %s118 = ssub.s32 %s8, 1
      %s119 = smul.u32 16, %s13
      %p120 = scmp.lt.s32.totalorder %s119, 31
      %s121 = scalar_select %p120, %s119, 31
      %s122 = smul.addr %s121, 4
      %s123 = scalar_lea.vmem %s0, %s122
      %p124 = pneg %p34
      %p125 = pneg %p31
      %p126 = pneg %p55
      %p127 = pneg %p52
      %p128 = pneg %p81
      %p129 = pneg %p78
      %s130 = smul.u32 16, %s13
      %p131 = scmp.lt.s32.totalorder %s130, 31
      %s132 = scalar_select %p131, %s130, 31
      %s133 = smul.addr %s132, 4
      %s134 = scalar_lea.vmem %s2, %s133
      %s135 = smul.u32 16, %s13
      %p136 = scmp.lt.s32.totalorder %s135, 31
      %s137 = scalar_select %p136, %s135, 31
      %s138 = smul.addr %s137, 4
      %s139 = scalar_lea.vmem %s0, %s138
      %s140 = smul.u32 16, %s13
      %s141 = smul.u32 16, %s13
      %p142 = scmp.lt.s32.totalorder %s141, 31
      %s143 = scalar_select %p142, %s141, 31
      %s144 = smul.addr %s143, 4
      %s145 = scalar_lea.vmem %s2, %s144
      %s146 = smul.u32 16, %s13
      %v148 = vld [vmem:[%s139] sm:$0xf]
      %v149 = vld [vmem:[%s139 + $0x4] sm:$0xf]
      %v150 = vld [vmem:[%s139 + $0x8] sm:$0xf]
      %v151 = vld [vmem:[%s139 + $0xc] sm:$0xf]
      %v152 = vld [vmem:[%s139 + $0x10] sm:$0xf]
      %v153 = vld [vmem:[%s139 + $0x14] sm:$0xf]
      %v154 = vld [vmem:[%s139 + $0x18] sm:$0xf]
      %v155 = vld [vmem:[%s139 + $0x1c] sm:$0xf]
      %v156 = vld [vmem:[%s139 + $0x20] sm:$0xf]
      %v157 = vld [vmem:[%s139 + $0x24] sm:$0xf]
      %v158 = vld [vmem:[%s139 + $0x28] sm:$0xf]
      %v159 = vld [vmem:[%s139 + $0x2c] sm:$0xf]
      %v160 = vld [vmem:[%s139 + $0x30] sm:$0xf]
      %v161 = vld [vmem:[%s139 + $0x34] sm:$0xf]
      %v162 = vld [vmem:[%s139 + $0x38] sm:$0xf]
      %v163 = vld [vmem:[%s139 + $0x3c] sm:$0xf]
      %v164 = vld [vmem:[%s1] sm:$0xf]
      %v165 = vld [vmem:[%s1 + $0x4] sm:$0xf]
      %v166 = vld [vmem:[%s1 + $0x8] sm:$0xf]
      %v167 = vld [vmem:[%s1 + $0xc] sm:$0xf]
      %v168 = vld [vmem:[%s1 + $0x10] sm:$0xf]
      %v169 = vld [vmem:[%s1 + $0x14] sm:$0xf]
      %v170 = vld [vmem:[%s1 + $0x18] sm:$0xf]
      %v171 = vld [vmem:[%s1 + $0x1c] sm:$0xf]
      %v172 = vld [vmem:[%s1 + $0x20] sm:$0xf]
      %v173 = vld [vmem:[%s1 + $0x24] sm:$0xf]
      %v174 = vld [vmem:[%s1 + $0x28] sm:$0xf]
      %v175 = vld [vmem:[%s1 + $0x2c] sm:$0xf]
      %v176 = vld [vmem:[%s1 + $0x30] sm:$0xf]
      %v177 = vld [vmem:[%s1 + $0x34] sm:$0xf]
      %v178 = vld [vmem:[%s1 + $0x38] sm:$0xf]
      %v179 = vld [vmem:[%s1 + $0x3c] sm:$0xf]
      %v196 = vunpack.c.l.b16 %v148
      %v197 = vunpack.c.l.b16 %v149
      %v198 = vunpack.c.l.b16 %v150
      %v199 = vunpack.c.l.b16 %v151
      %v200 = vunpack.c.l.b16 %v152
      %v201 = vunpack.c.l.b16 %v153
      %v202 = vunpack.c.l.b16 %v154
      %v203 = vunpack.c.l.b16 %v155
      %v204 = vunpack.c.l.b16 %v156
      %v205 = vunpack.c.l.b16 %v157
      %v206 = vunpack.c.l.b16 %v158
      %v207 = vunpack.c.l.b16 %v159
      %v208 = vunpack.c.l.b16 %v160
      %v209 = vunpack.c.l.b16 %v161
      %v210 = vunpack.c.l.b16 %v162
      %v211 = vunpack.c.l.b16 %v163
      %v212 = vpack.c.b16 %v197, %v196
      %v213 = vpack.c.b16 %v199, %v198
      %v214 = vpack.c.b16 %v201, %v200
      %v215 = vpack.c.b16 %v203, %v202
      %v216 = vpack.c.b16 %v205, %v204
      %v217 = vpack.c.b16 %v207, %v206
      %v218 = vpack.c.b16 %v209, %v208
      %v219 = vpack.c.b16 %v211, %v210
      %v244 = vunpack.c.l.b16 %v164
      %v245 = vunpack.c.l.b16 %v165
      %v246 = vunpack.c.l.b16 %v166
      %v247 = vunpack.c.l.b16 %v167
      %v248 = vunpack.c.l.b16 %v168
      %v249 = vunpack.c.l.b16 %v169
      %v250 = vunpack.c.l.b16 %v170
      %v251 = vunpack.c.l.b16 %v171
      %v252 = vunpack.c.l.b16 %v172
      %v253 = vunpack.c.l.b16 %v173
      %v254 = vunpack.c.l.b16 %v174
      %v255 = vunpack.c.l.b16 %v175
      %v256 = vunpack.c.l.b16 %v176
      %v257 = vunpack.c.l.b16 %v177
      %v258 = vunpack.c.l.b16 %v178
      %v259 = vunpack.c.l.b16 %v179
      %v260 = vpack.c.b16 %v245, %v244
      %v261 = vpack.c.b16 %v247, %v246
      %v262 = vpack.c.b16 %v249, %v248
      %v263 = vpack.c.b16 %v251, %v250
      %v264 = vpack.c.b16 %v253, %v252
      %v265 = vpack.c.b16 %v255, %v254
      %v266 = vpack.c.b16 %v257, %v256
      %v267 = vpack.c.b16 %v259, %v258
      %276 = vmatprep.subr.bf16.mxu0 0
      %277 = vmatpush1.bf16.msra.mxu0 %v260
      %278 = vmatprep.subr.bf16.mxu0 0
      %279 = vmatpush1.bf16.msra.mxu0 %v261
      %280 = vmatprep.subr.bf16.mxu0 0
      %281 = vmatpush1.bf16.msra.mxu0 %v262
      %282 = vmatprep.subr.bf16.mxu0 0
      %283 = vmatpush1.bf16.msra.mxu0 %v263
      %284 = vmatprep.subr.bf16.mxu0 0
      %285 = vmatpush1.bf16.msra.mxu0 %v264
      %286 = vmatprep.subr.bf16.mxu0 0
      %287 = vmatpush1.bf16.msra.mxu0 %v265
      %288 = vmatprep.subr.bf16.mxu0 0
      %289 = vmatpush1.bf16.msra.mxu0 %v266
      %290 = vmatprep.subr.bf16.mxu0 0
      %291 = vmatpush1.bf16.msra.mxu0 %v267
      %292 = vmatprep.subr.bf16.mxu0 0
      %293 = vmatpush1.bf16.msra.mxu0 0
      %294 = vmatprep.subr.bf16.mxu0 0
      %295 = vmatpush1.bf16.msra.mxu0 0
      %296 = vmatprep.subr.bf16.mxu0 0
      %297 = vmatpush1.bf16.msra.mxu0 0
      %298 = vmatprep.subr.bf16.mxu0 0
      %299 = vmatpush1.bf16.msra.mxu0 0
      %300 = vmatprep.subr.bf16.mxu0 0
      %301 = vmatpush1.bf16.msra.mxu0 0
      %302 = vmatprep.subr.bf16.mxu0 0
      %303 = vmatpush1.bf16.msra.mxu0 0
      %304 = vmatprep.subr.bf16.mxu0 0
      %305 = vmatpush1.bf16.msra.mxu0 0
      %306 = vmatprep.subr.bf16.mxu0 0
      %307 = vmatpush1.bf16.msra.mxu0 0
      %308 = vmatprep.mubr.bf16.mxu0 0
      %309 = vmatmul.mubr.bf16.gmra.mrb[0].mxu0 %v212
      %v310 = vpop.f32.mrb[0].mxu0
      %v311 = vadd.f32 0.0, %v310
      %v312 = vpop.f32.mrb[0].mxu0
      %v313 = vpop.f32.mrb[0].mxu0
      %v314 = vadd.f32 0.0, %v313
      %v315 = vpop.f32.mrb[0].mxu0
      %316 = vmatprep.mubr.bf16.mxu0 0
      %317 = vmatmul.mubr.bf16.gmra.mrb[0].mxu0 %v213
      %v318 = vpop.f32.mrb[0].mxu0
      %v319 = vadd.f32 0.0, %v318
      %v320 = vpop.f32.mrb[0].mxu0
      %v321 = vpop.f32.mrb[0].mxu0
      %v322 = vadd.f32 0.0, %v321
      %v323 = vpop.f32.mrb[0].mxu0
      %324 = vmatprep.mubr.bf16.mxu0 0
      %325 = vmatmul.mubr.bf16.gmra.mrb[0].mxu0 %v214
      %v326 = vpop.f32.mrb[0].mxu0
      %v327 = vadd.f32 0.0, %v326
      %v328 = vpop.f32.mrb[0].mxu0
      %v329 = vpop.f32.mrb[0].mxu0
      %v330 = vadd.f32 0.0, %v329
      %v331 = vpop.f32.mrb[0].mxu0
      %332 = vmatprep.mubr.bf16.mxu0 0
      %333 = vmatmul.mubr.bf16.gmra.mrb[0].mxu0 %v215
      %v334 = vpop.f32.mrb[0].mxu0
      %v335 = vadd.f32 0.0, %v334
      %v336 = vpop.f32.mrb[0].mxu0
      %v337 = vpop.f32.mrb[0].mxu0
      %v338 = vadd.f32 0.0, %v337
      %v339 = vpop.f32.mrb[0].mxu0
      %340 = vmatprep.mubr.bf16.mxu0 0
      %341 = vmatmul.mubr.bf16.gmra.mrb[0].mxu0 %v216
      %v342 = vpop.f32.mrb[0].mxu0
      %v343 = vadd.f32 0.0, %v342
      %v344 = vpop.f32.mrb[0].mxu0
      %v345 = vpop.f32.mrb[0].mxu0
      %v346 = vadd.f32 0.0, %v345
      %v347 = vpop.f32.mrb[0].mxu0
      %348 = vmatprep.mubr.bf16.mxu0 0
      %349 = vmatmul.mubr.bf16.gmra.mrb[0].mxu0 %v217
      %v350 = vpop.f32.mrb[0].mxu0
      %v351 = vadd.f32 0.0, %v350
      %v352 = vpop.f32.mrb[0].mxu0
      %v353 = vpop.f32.mrb[0].mxu0
      %v354 = vadd.f32 0.0, %v353
      %v355 = vpop.f32.mrb[0].mxu0
      %356 = vmatprep.mubr.bf16.mxu0 0
      %357 = vmatmul.mubr.bf16.gmra.mrb[0].mxu0 %v218
      %v358 = vpop.f32.mrb[0].mxu0
      %v359 = vadd.f32 0.0, %v358
      %v360 = vpop.f32.mrb[0].mxu0
      %v361 = vpop.f32.mrb[0].mxu0
      %v362 = vadd.f32 0.0, %v361
      %v363 = vpop.f32.mrb[0].mxu0
      %364 = vmatprep.mubr.bf16.mxu0 0
      %365 = vmatmul.mubr.bf16.gmra.mrb[0].mxu0 %v219
      %v366 = vpop.f32.mrb[0].mxu0
      %v367 = vadd.f32 0.0, %v366
      %v368 = vpop.f32.mrb[0].mxu0
      %v369 = vpop.f32.mrb[0].mxu0
      %v370 = vadd.f32 0.0, %v369
      %v371 = vpop.f32.mrb[0].mxu0
      %372 = vdwg.mxu0
      %v373 = vpack.c.bf16 %v314, %v311
      %v374 = vpack.c.bf16 %v322, %v319
      %v375 = vpack.c.bf16 %v330, %v327
      %v376 = vpack.c.bf16 %v338, %v335
      %v377 = vpack.c.bf16 %v346, %v343
      %v378 = vpack.c.bf16 %v354, %v351
      %v379 = vpack.c.bf16 %v362, %v359
      %v380 = vpack.c.bf16 %v370, %v367
      %v389 = vunpack.c.l.b16 %v373
      %v390 = vunpack.c.h.b16 %v373
      %v391 = vunpack.c.l.b16 %v374
      %v392 = vunpack.c.h.b16 %v374
      %v393 = vunpack.c.l.b16 %v375
      %v394 = vunpack.c.h.b16 %v375
      %v395 = vunpack.c.l.b16 %v376
      %v396 = vunpack.c.h.b16 %v376
      %v397 = vunpack.c.l.b16 %v377
      %v398 = vunpack.c.h.b16 %v377
      %v399 = vunpack.c.l.b16 %v378
      %v400 = vunpack.c.h.b16 %v378
      %v401 = vunpack.c.l.b16 %v379
      %v402 = vunpack.c.h.b16 %v379
      %v403 = vunpack.c.l.b16 %v380
      %v404 = vunpack.c.h.b16 %v380
      %v405 = vpack.c.b16 %v389, %v389
      %v406 = vpack.c.b16 %v390, %v390
      %v407 = vpack.c.b16 %v391, %v391
      %v408 = vpack.c.b16 %v392, %v392
      %v409 = vpack.c.b16 %v393, %v393
      %v410 = vpack.c.b16 %v394, %v394
      %v411 = vpack.c.b16 %v395, %v395
      %v412 = vpack.c.b16 %v396, %v396
      %v413 = vpack.c.b16 %v397, %v397
      %v414 = vpack.c.b16 %v398, %v398
      %v415 = vpack.c.b16 %v399, %v399
      %v416 = vpack.c.b16 %v400, %v400
      %v417 = vpack.c.b16 %v401, %v401
      %v418 = vpack.c.b16 %v402, %v402
      %v419 = vpack.c.b16 %v403, %v403
      %v420 = vpack.c.b16 %v404, %v404
      %437 = vst [vmem:[%s145] sm:$0xf] %v405
      %438 = vst [vmem:[%s145 + $0x4] sm:$0xf] %v406
      %439 = vst [vmem:[%s145 + $0x8] sm:$0xf] %v407
      %440 = vst [vmem:[%s145 + $0xc] sm:$0xf] %v408
      %441 = vst [vmem:[%s145 + $0x10] sm:$0xf] %v409
      %442 = vst [vmem:[%s145 + $0x14] sm:$0xf] %v410
      %443 = vst [vmem:[%s145 + $0x18] sm:$0xf] %v411
      %444 = vst [vmem:[%s145 + $0x1c] sm:$0xf] %v412
      %445 = vst [vmem:[%s145 + $0x20] sm:$0xf] %v413
      %446 = vst [vmem:[%s145 + $0x24] sm:$0xf] %v414
      %447 = vst [vmem:[%s145 + $0x28] sm:$0xf] %v415
      %448 = vst [vmem:[%s145 + $0x2c] sm:$0xf] %v416
      %449 = vst [vmem:[%s145 + $0x30] sm:$0xf] %v417
      %450 = vst [vmem:[%s145 + $0x34] sm:$0xf] %v418
      %451 = vst [vmem:[%s145 + $0x38] sm:$0xf] %v419
      %452 = vst [vmem:[%s145 + $0x3c] sm:$0xf] %v420
      %s453 = smul.u32 16, %s13
      %p454 = scmp.lt.s32.totalorder %s453, 31
      %s455 = scalar_select %p454, %s453, 31
      %s456 = smul.addr %s455, 4
      %s457 = scalar_lea.vmem %s2, %s456
      // Predicated region
      $region29: #{node_classifier_forward.3} parent=27 // pred_check
        %p458 = pneg %p78
      $region30: #{node_classifier_forward.3} parent=27 // pred_check_branch
        %460 = sbr.rel (%p458) target = $region32
      $region31: #{node_classifier_forward.3} parent=27 // pred_region
        %s461 = smul.u32 16, %s13
      $region32: #{node_classifier_forward.3} parent=27 // pred_fallthru
        _
    $region28: #{node_classifier_forward.3} parent=5 // pred_fallthru
      _
    %p462 = scmp.le.s32.totalorder 2, %s8
    // Predicated region
    $region33: #{node_classifier_forward.3} parent=5 // pred_check
      %p463 = pneg %p462
    $region34: #{node_classifier_forward.3} parent=5 // pred_check_branch
      %465 = sbr.rel (%p463) target = $region36
    $region35: #{node_classifier_forward.3} parent=5 // pred_region
      %s466 = ssub.s32 %s8, 2
      // Predicated region
      $region37: #{node_classifier_forward.3} parent=35 // pred_check
        %p467 = pneg %p84
      $region38: #{node_classifier_forward.3} parent=35 // pred_check_branch
        %469 = sbr.rel (%p467) target = $region40
      $region39: #{node_classifier_forward.3} parent=35 // pred_region
        %s470 = smul.u32 16, %s14
        %p471 = scmp.lt.s32.totalorder %s470, 31
        %s472 = scalar_select %p471, %s470, 31
        %s473 = smul.addr %s472, 4
        %s474 = scalar_lea.vmem %s2, %s473
      $region40: #{node_classifier_forward.3} parent=35 // pred_fallthru
        _
    $region36: #{node_classifier_forward.3} parent=5 // pred_fallthru
      _
  $region6: #{node_classifier_forward.3} parent=0 // loop_footer
    %s12 = sadd.s32 1, %s8
  $region7: #{node_classifier_forward.3} parent=0 // loop_footer_branch
    %7 = sbr.rel target = $region3
  $region8: #{node_classifier_forward.3} parent=0 // loop_exit
    _

// kernel: node_classifier_forward.4
$region0: #{node_classifier_forward.4}
  #allocation0 [shape = 'u32[]', space=smem, size = 0x4, offset = 0x4, fixed_abs, tag = 'smem constant byte address 0x4 - core index']
  #allocation1 [shape = 'u32[144,128]{1,0:T(1,128)}', space=vmem, size = 0x12000, scoped, tag = 'internal scratch']
  #allocation2 [shape = 'f32[128,128]{1,0:T(8,128)}', space=vmem, size = 0x10000, scoped, tag = 'scratch operand']
  %s0 = inlined_call_operand.vmem [shape: bf16[256,256], index: 0, kind: input, shape index: {}]
  %s1 = inlined_call_operand.vmem [shape: bf16[256,128], index: 1, kind: input, shape index: {}]
  %s2 = inlined_call_operand.vmem [shape: bf16[128,128], index: 2, kind: input, shape index: {}]
  %s3 = inlined_call_operand.vmem [shape: f32[1,128], index: 3, kind: input, shape index: {}]
  %s4 = inlined_call_operand.vmem [shape: bf16[256,128], index: 4, kind: output, shape index: {}]
  %s5 = sld [smem:[#allocation0]]
  $region57: #{node_classifier_forward.4} parent=0
    _
  %s7 = ssub.s32 1, %s5
  %s8 = scalar_select 0, %s7, %s5
  loop: start=0, step=1, limit=4
  $region2: #{node_classifier_forward.4} parent=0 // loop_pre_header
    _
  $region3: #{node_classifier_forward.4} parent=0 // loop_header
    %s10 = sphi 0, %s14
    %p11 = scmp.ge.s32.totalorder %s10, 4
    %s17 = sphi 0, %s29
    %s18 = sphi 0, %s25
    %s19 = sphi 0, %s17
    %s20 = sphi 0, %s18
    %s21 = sphi 0, %s19
    %s22 = sphi 0, %s20
    %s34 = sphi 0, %s36
    %s37 = sphi 0, %s34
    %s38 = sphi 0, %s37
    %s54 = sphi 0, %s38
    %s58 = sphi 0, %s58
    %s60 = sphi 0, %s58
    %s61 = sphi 0, %s60
    %s75 = sphi 0, %s61
    %s79 = sphi 0, %s79
    %s81 = sphi 0, %s79
    %s82 = sphi 0, %s81
    %s96 = sphi 0, %s82
    %s100 = sphi 0, %s100
    %s102 = sphi 0, %s100
    %s103 = sphi 0, %s102
    %s117 = sphi 0, %s103
    %s123 = sphi 0, %s125
    %s126 = sphi 0, %s123
    %s127 = sphi 0, %s126
    %s143 = sphi 0, %s127
  $region4: #{node_classifier_forward.4} parent=0 // loop_header_branch
    %13 = sbr.rel (%p11) target = $region8
  $region5: #{node_classifier_forward.4} parent=0 // loop_body
    %s15 = ssub.s32 %s10, 1
    %s16 = ssub.s32 %s10, 2
    %s23 = sadd.s32 1, %s18
    %p24 = scmp.ge.s32.totalorder %s23, 1
    %s25 = scalar_select %p24, 0, %s23
    %s26 = sadd.s32 1, %s17
    %s27 = scalar_select %p24, %s26, %s17
    %p28 = scmp.ge.s32.totalorder %s27, 2
    %s29 = scalar_select %p28, 0, %s27
    %s30 = ssub.s32 %s17, %s29
    %s31 = ssub.s32 %s18, %s25
    %s32 = sor.u32 %s30, %s31
    %p33 = scmp.eq.s32.totalorder %s32, 0
    %s35 = sadd.s32 %s34, 1
    %s36 = scalar_select %p33, %s34, %s35
    %p39 = pneg %p33
    %p40 = scmp.eq.s32.totalorder %s10, 1
    %p41 = por %p39, %p40
    %p42 = scmp.ne.s32.totalorder %s34, %s37
    %p43 = scmp.eq.s32.totalorder %s10, 0
    %p44 = por %p42, %p43
    %p45 = scmp.ne.s32.totalorder %s34, %s37
    %p46 = scmp.eq.s32.totalorder %s15, 1
    %p47 = por %p45, %p46
    %p48 = scmp.ne.s32.totalorder %s37, %s38
    %p49 = scmp.eq.s32.totalorder %s15, 0
    %p50 = por %p48, %p49
    %p51 = scmp.ne.s32.totalorder %s37, %s38
    %p52 = scmp.eq.s32.totalorder %s16, 1
    %p53 = por %p51, %p52
    %p55 = scmp.ne.s32.totalorder %s38, %s54
    %p56 = scmp.eq.s32.totalorder %s16, 0
    %p57 = por %p55, %p56
    %s59 = sadd.s32 %s58, 1
    %p62 = scmp.eq.s32.totalorder %s10, 1
    %p63 = scmp.ne.s32.totalorder %s58, %s60
    %p64 = scmp.eq.s32.totalorder %s10, 0
    %p65 = por %p63, %p64
    %p66 = scmp.ne.s32.totalorder %s58, %s60
    %p67 = scmp.eq.s32.totalorder %s15, 1
    %p68 = por %p66, %p67
    %p69 = scmp.ne.s32.totalorder %s60, %s61
    %p70 = scmp.eq.s32.totalorder %s15, 0
    %p71 = por %p69, %p70
    %p72 = scmp.ne.s32.totalorder %s60, %s61
    %p73 = scmp.eq.s32.totalorder %s16, 1
    %p74 = por %p72, %p73
    %p76 = scmp.ne.s32.totalorder %s61, %s75
    %p77 = scmp.eq.s32.totalorder %s16, 0
    %p78 = por %p76, %p77
    %s80 = sadd.s32 %s79, 1
    %p83 = scmp.eq.s32.totalorder %s10, 1
    %p84 = scmp.ne.s32.totalorder %s79, %s81
    %p85 = scmp.eq.s32.totalorder %s10, 0
    %p86 = por %p84, %p85
    %p87 = scmp.ne.s32.totalorder %s79, %s81
    %p88 = scmp.eq.s32.totalorder %s15, 1
    %p89 = por %p87, %p88
    %p90 = scmp.ne.s32.totalorder %s81, %s82
    %p91 = scmp.eq.s32.totalorder %s15, 0
    %p92 = por %p90, %p91
    %p93 = scmp.ne.s32.totalorder %s81, %s82
    %p94 = scmp.eq.s32.totalorder %s16, 1
    %p95 = por %p93, %p94
    %p97 = scmp.ne.s32.totalorder %s82, %s96
    %p98 = scmp.eq.s32.totalorder %s16, 0
    %p99 = por %p97, %p98
    %s101 = sadd.s32 %s100, 1
    %p104 = scmp.eq.s32.totalorder %s10, 1
    %p105 = scmp.ne.s32.totalorder %s100, %s102
    %p106 = scmp.eq.s32.totalorder %s10, 0
    %p107 = por %p105, %p106
    %p108 = scmp.ne.s32.totalorder %s100, %s102
    %p109 = scmp.eq.s32.totalorder %s15, 1
    %p110 = por %p108, %p109
    %p111 = scmp.ne.s32.totalorder %s102, %s103
    %p112 = scmp.eq.s32.totalorder %s15, 0
    %p113 = por %p111, %p112
    %p114 = scmp.ne.s32.totalorder %s102, %s103
    %p115 = scmp.eq.s32.totalorder %s16, 1
    %p116 = por %p114, %p115
    %p118 = scmp.ne.s32.totalorder %s103, %s117
    %p119 = scmp.eq.s32.totalorder %s16, 0
    %p120 = por %p118, %p119
    %s121 = ssub.s32 %s17, %s29
    %p122 = scmp.eq.s32.totalorder %s121, 0
    %s124 = sadd.s32 %s123, 1
    %s125 = scalar_select %p122, %s123, %s124
    %p128 = pneg %p122
    %p129 = scmp.eq.s32.totalorder %s10, 1
    %p130 = por %p128, %p129
    %p131 = scmp.ne.s32.totalorder %s123, %s126
    %p132 = scmp.eq.s32.totalorder %s10, 0
    %p133 = por %p131, %p132
    %p134 = scmp.ne.s32.totalorder %s123, %s126
    %p135 = scmp.eq.s32.totalorder %s15, 1
    %p136 = por %p134, %p135
    %p137 = scmp.ne.s32.totalorder %s126, %s127
    %p138 = scmp.eq.s32.totalorder %s15, 0
    %p139 = por %p137, %p138
    %p140 = scmp.ne.s32.totalorder %s126, %s127
    %p141 = scmp.eq.s32.totalorder %s16, 1
    %p142 = por %p140, %p141
    %p144 = scmp.ne.s32.totalorder %s127, %s143
    %p145 = scmp.eq.s32.totalorder %s16, 0
    %p146 = por %p144, %p145
    %p147 = scmp.le.s32.totalorder 1, %s10
    %p148 = scmp.lt.s32.totalorder %s10, 3
    %p149 = pnand %p147, %p148
    %p150 = pneg %p149
    // Predicated region
    $region9: #{node_classifier_forward.4} parent=5 // pred_check
      _
    $region10: #{node_classifier_forward.4} parent=5 // pred_check_branch
      %152 = sbr.rel (%p149) target = $region12
    $region11: #{node_classifier_forward.4} parent=5 // pred_region
      %s153 = ssub.s32 %s10, 1
      // Predicated region
      $region13: #{node_classifier_forward.4} parent=11 // pred_check
        %p154 = pneg %p71
      $region14: #{node_classifier_forward.4} parent=11 // pred_check_branch
        %156 = sbr.rel (%p154) target = $region16
      $region15: #{node_classifier_forward.4} parent=11 // pred_region
        _
      $region16: #{node_classifier_forward.4} parent=11 // pred_fallthru
        _
      // Predicated region
      $region17: #{node_classifier_forward.4} parent=11 // pred_check
        %p157 = pneg %p92
      $region18: #{node_classifier_forward.4} parent=11 // pred_check_branch
        %159 = sbr.rel (%p157) target = $region20
      $region19: #{node_classifier_forward.4} parent=11 // pred_region
        _
      $region20: #{node_classifier_forward.4} parent=11 // pred_fallthru
        _
      // Predicated region
      $region21: #{node_classifier_forward.4} parent=11 // pred_check
        %p160 = pneg %p113
      $region22: #{node_classifier_forward.4} parent=11 // pred_check_branch
        %162 = sbr.rel (%p160) target = $region24
      $region23: #{node_classifier_forward.4} parent=11 // pred_region
        _
      $region24: #{node_classifier_forward.4} parent=11 // pred_fallthru
        _
    $region12: #{node_classifier_forward.4} parent=5 // pred_fallthru
      _
    %p163 = scmp.lt.s32.totalorder %s10, 2
    // Predicated region
    $region25: #{node_classifier_forward.4} parent=5 // pred_check
      %p164 = pneg %p163
    $region26: #{node_classifier_forward.4} parent=5 // pred_check_branch
      %166 = sbr.rel (%p164) target = $region28
    $region27: #{node_classifier_forward.4} parent=5 // pred_region
      // Predicated region
      $region29: #{node_classifier_forward.4} parent=27 // pred_check
        %p167 = pneg %p44
      $region30: #{node_classifier_forward.4} parent=27 // pred_check_branch
        %169 = sbr.rel (%p167) target = $region32
      $region31: #{node_classifier_forward.4} parent=27 // pred_region
        %s170 = smul.u32 16, %s17
        %s171 = smul.u32 2, %s18
        %p172 = scmp.lt.s32.totalorder %s170, 31
        %s173 = scalar_select %p172, %s170, 31
        %p174 = scmp.lt.s32.totalorder %s171, 1
        %s175 = scalar_select %p174, %s171, 1
        %s176 = smul.addr %s173, 2
        %s177 = sadd.s32 %s175, %s176
        %s178 = smul.addr %s177, 4
        %s179 = scalar_lea.vmem %s0, %s178
        %s180 = smul.u32 16, %s17
        %s181 = smul.u32 2, %s18
      $region32: #{node_classifier_forward.4} parent=27 // pred_fallthru
        _
    $region28: #{node_classifier_forward.4} parent=5 // pred_fallthru
      _
    %p182 = scmp.le.s32.totalorder 1, %s10
    %p183 = scmp.lt.s32.totalorder %s10, 3
    %p184 = pnand %p182, %p183
    %p185 = pneg %p184
    // Predicated region
    $region33: #{node_classifier_forward.4} parent=5 // pred_check
      _
    $region34: #{node_classifier_forward.4} parent=5 // pred_check_branch
      %187 = sbr.rel (%p184) target = $region36
    $region35: #{node_classifier_forward.4} parent=5 // pred_region
      %s188 = ssub.s32 %s10, 1
      %s189 = smul.u32 16, %s19
      %s190 = smul.u32 2, %s20
      %p191 = scmp.lt.s32.totalorder %s189, 31
      %s192 = scalar_select %p191, %s189, 31
      %p193 = scmp.lt.s32.totalorder %s190, 1
      %s194 = scalar_select %p193, %s190, 1
      %s195 = smul.addr %s192, 2
      %s196 = sadd.s32 %s194, %s195
      %s197 = smul.addr %s196, 4
      %s198 = scalar_lea.vmem %s0, %s197
      %p199 = pneg %p50
      %p200 = pneg %p47
      %p201 = pneg %p71
      %p202 = pneg %p68
      %p203 = pneg %p92
      %p204 = pneg %p89
      %p205 = pneg %p113
      %p206 = pneg %p110
      %p207 = pneg %p139
      %p208 = pneg %p136
      %s209 = smul.u32 16, %s19
      %p210 = scmp.lt.s32.totalorder %s209, 31
      %s211 = scalar_select %p210, %s209, 31
      %s212 = smul.addr %s211, 4
      %s213 = scalar_lea.vmem %s4, %s212
      %s214 = smul.u32 16, %s19
      %s215 = smul.u32 2, %s20
      %p216 = scmp.lt.s32.totalorder %s214, 31
      %s217 = scalar_select %p216, %s214, 31
      %p218 = scmp.lt.s32.totalorder %s215, 1
      %s219 = scalar_select %p218, %s215, 1
      %s220 = smul.addr %s217, 2
      %s221 = sadd.s32 %s219, %s220
      %s222 = smul.addr %s221, 4
      %s223 = scalar_lea.vmem %s0, %s222
      %s224 = smul.u32 16, %s19
      %s225 = smul.u32 2, %s20
      %s226 = smul.u32 16, %s19
      %p227 = scmp.lt.s32.totalorder %s226, 31
      %s228 = scalar_select %p227, %s226, 31
      %s229 = smul.addr %s228, 4
      %s230 = scalar_lea.vmem %s4, %s229
      %s231 = smul.u32 16, %s19
      %p233 = scmp.eq.s32.totalorder %s20, 0
      // Predicated region
      $region37: #{node_classifier_forward.4} parent=35 // pred_check
        %p234 = pneg %p233
      $region38: #{node_classifier_forward.4} parent=35 // pred_check_branch
        %236 = sbr.rel (%p234) target = $region40
      $region39: #{node_classifier_forward.4} parent=35 // pred_region
        %237 = vst [vmem:[#allocation2] sm:$0xff] 0.0
        %238 = vst [vmem:[#allocation2 + $0x8] sm:$0xff] 0.0
        %239 = vst [vmem:[#allocation2 + $0x10] sm:$0xff] 0.0
        %240 = vst [vmem:[#allocation2 + $0x18] sm:$0xff] 0.0
        %241 = vst [vmem:[#allocation2 + $0x20] sm:$0xff] 0.0
        %242 = vst [vmem:[#allocation2 + $0x28] sm:$0xff] 0.0
        %243 = vst [vmem:[#allocation2 + $0x30] sm:$0xff] 0.0
        %244 = vst [vmem:[#allocation2 + $0x38] sm:$0xff] 0.0
        %245 = vst [vmem:[#allocation2 + $0x40] sm:$0xff] 0.0
        %246 = vst [vmem:[#allocation2 + $0x48] sm:$0xff] 0.0
        %247 = vst [vmem:[#allocation2 + $0x50] sm:$0xff] 0.0
        %248 = vst [vmem:[#allocation2 + $0x58] sm:$0xff] 0.0
        %249 = vst [vmem:[#allocation2 + $0x60] sm:$0xff] 0.0
        %250 = vst [vmem:[#allocation2 + $0x68] sm:$0xff] 0.0
        %251 = vst [vmem:[#allocation2 + $0x70] sm:$0xff] 0.0
        %252 = vst [vmem:[#allocation2 + $0x78] sm:$0xff] 0.0
      $region40: #{node_classifier_forward.4} parent=35 // pred_fallthru
        _
      %s253 = smul.u32 %s20, 256
      %s254 = sshra.s32 %s253, 3
      %s255 = sand.u32 %s253, 7
      %s256 = smul.addr %s254, 4
      %s257 = scalar_lea.vmem %s1, %s256
      %v258 = vld [vmem:[%s257] sm:$0xf]
      %v259 = vld [vmem:[%s257 + $0x4] sm:$0xf]
      %v260 = vld [vmem:[%s257 + $0x8] sm:$0xf]
      %v261 = vld [vmem:[%s257 + $0xc] sm:$0xf]
      %v262 = vld [vmem:[%s257 + $0x10] sm:$0xf]
      %v263 = vld [vmem:[%s257 + $0x14] sm:$0xf]
      %v264 = vld [vmem:[%s257 + $0x18] sm:$0xf]
      %v265 = vld [vmem:[%s257 + $0x1c] sm:$0xf]
      %v266 = vld [vmem:[%s257 + $0x20] sm:$0xf]
      %v267 = vld [vmem:[%s257 + $0x24] sm:$0xf]
      %v268 = vld [vmem:[%s257 + $0x28] sm:$0xf]
      %v269 = vld [vmem:[%s257 + $0x2c] sm:$0xf]
      %v270 = vld [vmem:[%s257 + $0x30] sm:$0xf]
      %v271 = vld [vmem:[%s257 + $0x34] sm:$0xf]
      %v272 = vld [vmem:[%s257 + $0x38] sm:$0xf]
      %v273 = vld [vmem:[%s257 + $0x3c] sm:$0xf]
      %v274 = vld [vmem:[%s257 + $0x40] sm:$0xf]
      %v275 = vld [vmem:[%s257 + $0x44] sm:$0xf]
      %v276 = vld [vmem:[%s257 + $0x48] sm:$0xf]
      %v277 = vld [vmem:[%s257 + $0x4c] sm:$0xf]
      %v278 = vld [vmem:[%s257 + $0x50] sm:$0xf]
      %v279 = vld [vmem:[%s257 + $0x54] sm:$0xf]
      %v280 = vld [vmem:[%s257 + $0x58] sm:$0xf]
      %v281 = vld [vmem:[%s257 + $0x5c] sm:$0xf]
      %v282 = vld [vmem:[%s257 + $0x60] sm:$0xf]
      %v283 = vld [vmem:[%s257 + $0x64] sm:$0xf]
      %v284 = vld [vmem:[%s257 + $0x68] sm:$0xf]
      %v285 = vld [vmem:[%s257 + $0x6c] sm:$0xf]
      %v286 = vld [vmem:[%s257 + $0x70] sm:$0xf]
      %v287 = vld [vmem:[%s257 + $0x74] sm:$0xf]
      %v288 = vld [vmem:[%s257 + $0x78] sm:$0xf]
      %v289 = vld [vmem:[%s257 + $0x7c] sm:$0xf]
      %v290 = vld [vmem:[#allocation2] sm:$0xff]
      %v291 = vld [vmem:[#allocation2 + $0x8] sm:$0xff]
      %v292 = vld [vmem:[#allocation2 + $0x10] sm:$0xff]
      %v293 = vld [vmem:[#allocation2 + $0x18] sm:$0xff]
      %v294 = vld [vmem:[#allocation2 + $0x20] sm:$0xff]
      %v295 = vld [vmem:[#allocation2 + $0x28] sm:$0xff]
      %v296 = vld [vmem:[#allocation2 + $0x30] sm:$0xff]
      %v297 = vld [vmem:[#allocation2 + $0x38] sm:$0xff]
      %v298 = vld [vmem:[#allocation2 + $0x40] sm:$0xff]
      %v299 = vld [vmem:[#allocation2 + $0x48] sm:$0xff]
      %v300 = vld [vmem:[#allocation2 + $0x50] sm:$0xff]
      %v301 = vld [vmem:[#allocation2 + $0x58] sm:$0xff]
      %v302 = vld [vmem:[#allocation2 + $0x60] sm:$0xff]
      %v303 = vld [vmem:[#allocation2 + $0x68] sm:$0xff]
      %v304 = vld [vmem:[#allocation2 + $0x70] sm:$0xff]
      %v305 = vld [vmem:[#allocation2 + $0x78] sm:$0xff]
      %v306 = vld [vmem:[%s223] sm:$0xff]
      %v307 = vld [vmem:[%s223 + $0x8] sm:$0xff]
      %v308 = vld [vmem:[%s223 + $0x10] sm:$0xff]
      %v309 = vld [vmem:[%s223 + $0x18] sm:$0xff]
      %v310 = vld [vmem:[%s223 + $0x20] sm:$0xff]
      %v311 = vld [vmem:[%s223 + $0x28] sm:$0xff]
      %v312 = vld [vmem:[%s223 + $0x30] sm:$0xff]
      %v313 = vld [vmem:[%s223 + $0x38] sm:$0xff]
      %v314 = vld [vmem:[%s223 + $0x40] sm:$0xff]
      %v315 = vld [vmem:[%s223 + $0x48] sm:$0xff]
      %v316 = vld [vmem:[%s223 + $0x50] sm:$0xff]
      %v317 = vld [vmem:[%s223 + $0x58] sm:$0xff]
      %v318 = vld [vmem:[%s223 + $0x60] sm:$0xff]
      %v319 = vld [vmem:[%s223 + $0x68] sm:$0xff]
      %v320 = vld [vmem:[%s223 + $0x70] sm:$0xff]
      %v321 = vld [vmem:[%s223 + $0x78] sm:$0xff]
      %v338 = vunpack.c.l.b16 %v306
      %v339 = vunpack.c.h.b16 %v306
      %v340 = vunpack.c.l.b16 %v307
      %v341 = vunpack.c.h.b16 %v307
      %v342 = vunpack.c.l.b16 %v308
      %v343 = vunpack.c.h.b16 %v308
      %v344 = vunpack.c.l.b16 %v309
      %v345 = vunpack.c.h.b16 %v309
      %v346 = vunpack.c.l.b16 %v310
      %v347 = vunpack.c.h.b16 %v310
      %v348 = vunpack.c.l.b16 %v311
      %v349 = vunpack.c.h.b16 %v311
      %v350 = vunpack.c.l.b16 %v312
      %v351 = vunpack.c.h.b16 %v312
      %v352 = vunpack.c.l.b16 %v313
      %v353 = vunpack.c.h.b16 %v313
      %v354 = vunpack.c.l.b16 %v314
      %v355 = vunpack.c.h.b16 %v314
      %v356 = vunpack.c.l.b16 %v315
      %v357 = vunpack.c.h.b16 %v315
      %v358 = vunpack.c.l.b16 %v316
      %v359 = vunpack.c.h.b16 %v316
      %v360 = vunpack.c.l.b16 %v317
      %v361 = vunpack.c.h.b16 %v317
      %v362 = vunpack.c.l.b16 %v318
      %v363 = vunpack.c.h.b16 %v318
      %v364 = vunpack.c.l.b16 %v319
      %v365 = vunpack.c.h.b16 %v319
      %v366 = vunpack.c.l.b16 %v320
      %v367 = vunpack.c.h.b16 %v320
      %v368 = vunpack.c.l.b16 %v321
      %v369 = vunpack.c.h.b16 %v321
      %v370 = vpack.c.b16 %v340, %v338
      %v371 = vpack.c.b16 %v341, %v339
      %v372 = vpack.c.b16 %v344, %v342
      %v373 = vpack.c.b16 %v345, %v343
      %v374 = vpack.c.b16 %v348, %v346
      %v375 = vpack.c.b16 %v349, %v347
      %v376 = vpack.c.b16 %v352, %v350
      %v377 = vpack.c.b16 %v353, %v351
      %v378 = vpack.c.b16 %v356, %v354
      %v379 = vpack.c.b16 %v357, %v355
      %v380 = vpack.c.b16 %v360, %v358
      %v381 = vpack.c.b16 %v361, %v359
      %v382 = vpack.c.b16 %v364, %v362
      %v383 = vpack.c.b16 %v365, %v363
      %v384 = vpack.c.b16 %v368, %v366
      %v385 = vpack.c.b16 %v369, %v367
      %v434 = vunpack.c.l.b16 %v258
      %v435 = vunpack.c.l.b16 %v259
      %v436 = vunpack.c.l.b16 %v260
      %v437 = vunpack.c.l.b16 %v261
      %v438 = vunpack.c.l.b16 %v262
      %v439 = vunpack.c.l.b16 %v263
      %v440 = vunpack.c.l.b16 %v264
      %v441 = vunpack.c.l.b16 %v265
      %v442 = vunpack.c.l.b16 %v266
      %v443 = vunpack.c.l.b16 %v267
      %v444 = vunpack.c.l.b16 %v268
      %v445 = vunpack.c.l.b16 %v269
      %v446 = vunpack.c.l.b16 %v270
      %v447 = vunpack.c.l.b16 %v271
      %v448 = vunpack.c.l.b16 %v272
      %v449 = vunpack.c.l.b16 %v273
      %v450 = vunpack.c.l.b16 %v274
      %v451 = vunpack.c.l.b16 %v275
      %v452 = vunpack.c.l.b16 %v276
      %v453 = vunpack.c.l.b16 %v277
      %v454 = vunpack.c.l.b16 %v278
      %v455 = vunpack.c.l.b16 %v279
      %v456 = vunpack.c.l.b16 %v280
      %v457 = vunpack.c.l.b16 %v281
      %v458 = vunpack.c.l.b16 %v282
      %v459 = vunpack.c.l.b16 %v283
      %v460 = vunpack.c.l.b16 %v284
      %v461 = vunpack.c.l.b16 %v285
      %v462 = vunpack.c.l.b16 %v286
      %v463 = vunpack.c.l.b16 %v287
      %v464 = vunpack.c.l.b16 %v288
      %v465 = vunpack.c.l.b16 %v289
      %v466 = vpack.c.b16 %v435, %v434
      %v467 = vpack.c.b16 %v437, %v436
      %v468 = vpack.c.b16 %v439, %v438
      %v469 = vpack.c.b16 %v441, %v440
      %v470 = vpack.c.b16 %v443, %v442
      %v471 = vpack.c.b16 %v445, %v444
      %v472 = vpack.c.b16 %v447, %v446
      %v473 = vpack.c.b16 %v449, %v448
      %v474 = vpack.c.b16 %v451, %v450
      %v475 = vpack.c.b16 %v453, %v452
      %v476 = vpack.c.b16 %v455, %v454
      %v477 = vpack.c.b16 %v457, %v456
      %v478 = vpack.c.b16 %v459, %v458
      %v479 = vpack.c.b16 %v461, %v460
      %v480 = vpack.c.b16 %v463, %v462
      %v481 = vpack.c.b16 %v465, %v464
      %498 = vmatprep.subr.bf16.mxu0 0
      %499 = vmatpush1.bf16.msra.mxu0 %v466
      %500 = vmatprep.subr.bf16.mxu0 0
      %501 = vmatpush1.bf16.msra.mxu0 %v467
      %502 = vmatprep.subr.bf16.mxu0 0
      %503 = vmatpush1.bf16.msra.mxu0 %v468
      %504 = vmatprep.subr.bf16.mxu0 0
      %505 = vmatpush1.bf16.msra.mxu0 %v469
      %506 = vmatprep.subr.bf16.mxu0 0
      %507 = vmatpush1.bf16.msra.mxu0 %v470
      %508 = vmatprep.subr.bf16.mxu0 0
      %509 = vmatpush1.bf16.msra.mxu0 %v471
      %510 = vmatprep.subr.bf16.mxu0 0
      %511 = vmatpush1.bf16.msra.mxu0 %v472
      %512 = vmatprep.subr.bf16.mxu0 0
      %513 = vmatpush1.bf16.msra.mxu0 %v473
      %514 = vmatprep.subr.bf16.mxu0 0
      %515 = vmatpush1.bf16.msra.mxu0 %v474
      %516 = vmatprep.subr.bf16.mxu0 0
      %517 = vmatpush1.bf16.msra.mxu0 %v475
      %518 = vmatprep.subr.bf16.mxu0 0
      %519 = vmatpush1.bf16.msra.mxu0 %v476
      %520 = vmatprep.subr.bf16.mxu0 0
      %521 = vmatpush1.bf16.msra.mxu0 %v477
      %522 = vmatprep.subr.bf16.mxu0 0
      %523 = vmatpush1.bf16.msra.mxu0 %v478
      %524 = vmatprep.subr.bf16.mxu0 0
      %525 = vmatpush1.bf16.msra.mxu0 %v479
      %526 = vmatprep.subr.bf16.mxu0 0
      %527 = vmatpush1.bf16.msra.mxu0 %v480
      %528 = vmatprep.subr.bf16.mxu0 0
      %529 = vmatpush1.bf16.msra.mxu0 %v481
      %530 = vmatprep.mubr.bf16.mxu0 %v371
      %531 = vmatmul.mubr.bf16.gmra.mrb[0].mxu0 %v370
      %v532 = vpop.f32.mrb[0].mxu0
      %v533 = vadd.f32 0.0, %v532
      %v534 = vpop.f32.mrb[0].mxu0
      %v535 = vpop.f32.mrb[0].mxu0
      %v536 = vadd.f32 0.0, %v535
      %v537 = vpop.f32.mrb[0].mxu0
      %538 = vmatprep.mubr.bf16.mxu0 %v373
      %539 = vmatmul.mubr.bf16.gmra.mrb[0].mxu0 %v372
      %v540 = vpop.f32.mrb[0].mxu0
      %v541 = vadd.f32 0.0, %v540
      %v542 = vpop.f32.mrb[0].mxu0
      %v543 = vpop.f32.mrb[0].mxu0
      %v544 = vadd.f32 0.0, %v543
      %v545 = vpop.f32.mrb[0].mxu0
      %546 = vmatprep.mubr.bf16.mxu0 %v375
      %547 = vmatmul.mubr.bf16.gmra.mrb[0].mxu0 %v374
      %v548 = vpop.f32.mrb[0].mxu0
      %v549 = vadd.f32 0.0, %v548
      %v550 = vpop.f32.mrb[0].mxu0
      %v551 = vpop.f32.mrb[0].mxu0
      %v552 = vadd.f32 0.0, %v551
      %v553 = vpop.f32.mrb[0].mxu0
      %554 = vmatprep.mubr.bf16.mxu0 %v377
      %555 = vmatmul.mubr.bf16.gmra.mrb[0].mxu0 %v376
      %v556 = vpop.f32.mrb[0].mxu0
      %v557 = vadd.f32 0.0, %v556
      %v558 = vpop.f32.mrb[0].mxu0
      %v559 = vpop.f32.mrb[0].mxu0
      %v560 = vadd.f32 0.0, %v559
      %v561 = vpop.f32.mrb[0].mxu0
      %562 = vmatprep.mubr.bf16.mxu0 %v379
      %563 = vmatmul.mubr.bf16.gmra.mrb[0].mxu0 %v378
      %v564 = vpop.f32.mrb[0].mxu0
      %v565 = vadd.f32 0.0, %v564
      %v566 = vpop.f32.mrb[0].mxu0
      %v567 = vpop.f32.mrb[0].mxu0
      %v568 = vadd.f32 0.0, %v567
      %v569 = vpop.f32.mrb[0].mxu0
      %570 = vmatprep.mubr.bf16.mxu0 %v381
      %571 = vmatmul.mubr.bf16.gmra.mrb[0].mxu0 %v380
      %v572 = vpop.f32.mrb[0].mxu0
      %v573 = vadd.f32 0.0, %v572
      %v574 = vpop.f32.mrb[0].mxu0
      %v575 = vpop.f32.mrb[0].mxu0
      %v576 = vadd.f32 0.0, %v575
      %v577 = vpop.f32.mrb[0].mxu0
      %578 = vmatprep.mubr.bf16.mxu0 %v383
      %579 = vmatmul.mubr.bf16.gmra.mrb[0].mxu0 %v382
      %v580 = vpop.f32.mrb[0].mxu0
      %v581 = vadd.f32 0.0, %v580
      %v582 = vpop.f32.mrb[0].mxu0
      %v583 = vpop.f32.mrb[0].mxu0
      %v584 = vadd.f32 0.0, %v583
      %v585 = vpop.f32.mrb[0].mxu0
      %586 = vmatprep.mubr.bf16.mxu0 %v385
      %587 = vmatmul.mubr.bf16.gmra.mrb[0].mxu0 %v384
      %v588 = vpop.f32.mrb[0].mxu0
      %v589 = vadd.f32 0.0, %v588
      %v590 = vpop.f32.mrb[0].mxu0
      %v591 = vpop.f32.mrb[0].mxu0
      %v592 = vadd.f32 0.0, %v591
      %v593 = vpop.f32.mrb[0].mxu0
      %594 = vdwg.mxu0
      %v595 = vadd.f32 %v290, %v533
      %v596 = vadd.f32 %v291, %v536
      %v597 = vadd.f32 %v292, %v541
      %v598 = vadd.f32 %v293, %v544
      %v599 = vadd.f32 %v294, %v549
      %v600 = vadd.f32 %v295, %v552
      %v601 = vadd.f32 %v296, %v557
      %v602 = vadd.f32 %v297, %v560
      %v603 = vadd.f32 %v298, %v565
      %v604 = vadd.f32 %v299, %v568
      %v605 = vadd.f32 %v300, %v573
      %v606 = vadd.f32 %v301, %v576
      %v607 = vadd.f32 %v302, %v581
      %v608 = vadd.f32 %v303, %v584
      %v609 = vadd.f32 %v304, %v589
      %v610 = vadd.f32 %v305, %v592
      %611 = vst [vmem:[#allocation2] sm:$0xff] %v595
      %612 = vst [vmem:[#allocation2 + $0x8] sm:$0xff] %v596
      %613 = vst [vmem:[#allocation2 + $0x10] sm:$0xff] %v597
      %614 = vst [vmem:[#allocation2 + $0x18] sm:$0xff] %v598
      %615 = vst [vmem:[#allocation2 + $0x20] sm:$0xff] %v599
      %616 = vst [vmem:[#allocation2 + $0x28] sm:$0xff] %v600
      %617 = vst [vmem:[#allocation2 + $0x30] sm:$0xff] %v601
      %618 = vst [vmem:[#allocation2 + $0x38] sm:$0xff] %v602
      %619 = vst [vmem:[#allocation2 + $0x40] sm:$0xff] %v603
      %620 = vst [vmem:[#allocation2 + $0x48] sm:$0xff] %v604
      %621 = vst [vmem:[#allocation2 + $0x50] sm:$0xff] %v605
      %622 = vst [vmem:[#allocation2 + $0x58] sm:$0xff] %v606
      %623 = vst [vmem:[#allocation2 + $0x60] sm:$0xff] %v607
      %624 = vst [vmem:[#allocation2 + $0x68] sm:$0xff] %v608
      %625 = vst [vmem:[#allocation2 + $0x70] sm:$0xff] %v609
      %626 = vst [vmem:[#allocation2 + $0x78] sm:$0xff] %v610
      // Predicated region
      $region41: #{node_classifier_forward.4} parent=35 // pred_check
        %p627 = pneg %p233
      $region42: #{node_classifier_forward.4} parent=35 // pred_check_branch
        %629 = sbr.rel (%p627) target = $region44
      $region43: #{node_classifier_forward.4} parent=35 // pred_region
        %v630 = vld [vmem:[#allocation2] sm:$0xff]
        %v631 = vld [vmem:[#allocation2 + $0x8] sm:$0xff]
        %v632 = vld [vmem:[#allocation2 + $0x10] sm:$0xff]
        %v633 = vld [vmem:[#allocation2 + $0x18] sm:$0xff]
        %v634 = vld [vmem:[#allocation2 + $0x20] sm:$0xff]
        %v635 = vld [vmem:[#allocation2 + $0x28] sm:$0xff]
        %v636 = vld [vmem:[#allocation2 + $0x30] sm:$0xff]
        %v637 = vld [vmem:[#allocation2 + $0x38] sm:$0xff]
        %v638 = vld [vmem:[#allocation2 + $0x40] sm:$0xff]
        %v639 = vld [vmem:[#allocation2 + $0x48] sm:$0xff]
        %v640 = vld [vmem:[#allocation2 + $0x50] sm:$0xff]
        %v641 = vld [vmem:[#allocation2 + $0x58] sm:$0xff]
        %v642 = vld [vmem:[#allocation2 + $0x60] sm:$0xff]
        %v643 = vld [vmem:[#allocation2 + $0x68] sm:$0xff]
        %v644 = vld [vmem:[#allocation2 + $0x70] sm:$0xff]
        %v645 = vld [vmem:[#allocation2 + $0x78] sm:$0xff]
        %v646 = vld [vmem:[%s3] sm:$0x1]
        %v648 = vlaneseq
        %v649 = vshrl.u32 %v648, 7
        %v650 = vsub.s32 0, %v649
        %v651 = vrot.slane %v646, %v650
        %v653 = vadd.f32 %v630, %v651
        %v654 = vadd.f32 %v631, %v651
        %v655 = vadd.f32 %v632, %v651
        %v656 = vadd.f32 %v633, %v651
        %v657 = vadd.f32 %v634, %v651
        %v658 = vadd.f32 %v635, %v651
        %v659 = vadd.f32 %v636, %v651
        %v660 = vadd.f32 %v637, %v651
        %v661 = vadd.f32 %v638, %v651
        %v662 = vadd.f32 %v639, %v651
        %v663 = vadd.f32 %v640, %v651
        %v664 = vadd.f32 %v641, %v651
        %v665 = vadd.f32 %v642, %v651
        %v666 = vadd.f32 %v643, %v651
        %v667 = vadd.f32 %v644, %v651
        %v668 = vadd.f32 %v645, %v651
        %v669 = vmax.f32 %v653, 0.0
        %v670 = vmax.f32 %v654, 0.0
        %v671 = vmax.f32 %v655, 0.0
        %v672 = vmax.f32 %v656, 0.0
        %v673 = vmax.f32 %v657, 0.0
        %v674 = vmax.f32 %v658, 0.0
        %v675 = vmax.f32 %v659, 0.0
        %v676 = vmax.f32 %v660, 0.0
        %v677 = vmax.f32 %v661, 0.0
        %v678 = vmax.f32 %v662, 0.0
        %v679 = vmax.f32 %v663, 0.0
        %v680 = vmax.f32 %v664, 0.0
        %v681 = vmax.f32 %v665, 0.0
        %v682 = vmax.f32 %v666, 0.0
        %v683 = vmax.f32 %v667, 0.0
        %v684 = vmax.f32 %v668, 0.0
        %v685 = vpack.c.bf16 %v670, %v669
        %v686 = vpack.c.bf16 %v672, %v671
        %v687 = vpack.c.bf16 %v674, %v673
        %v688 = vpack.c.bf16 %v676, %v675
        %v689 = vpack.c.bf16 %v678, %v677
        %v690 = vpack.c.bf16 %v680, %v679
        %v691 = vpack.c.bf16 %v682, %v681
        %v692 = vpack.c.bf16 %v684, %v683
        %v693 = vld [vmem:[%s2] sm:$0xf]
        %v694 = vld [vmem:[%s2 + $0x4] sm:$0xf]
        %v695 = vld [vmem:[%s2 + $0x8] sm:$0xf]
        %v696 = vld [vmem:[%s2 + $0xc] sm:$0xf]
        %v697 = vld [vmem:[%s2 + $0x10] sm:$0xf]
        %v698 = vld [vmem:[%s2 + $0x14] sm:$0xf]
        %v699 = vld [vmem:[%s2 + $0x18] sm:$0xf]
        %v700 = vld [vmem:[%s2 + $0x1c] sm:$0xf]
        %v701 = vld [vmem:[%s2 + $0x20] sm:$0xf]
        %v702 = vld [vmem:[%s2 + $0x24] sm:$0xf]
        %v703 = vld [vmem:[%s2 + $0x28] sm:$0xf]
        %v704 = vld [vmem:[%s2 + $0x2c] sm:$0xf]
        %v705 = vld [vmem:[%s2 + $0x30] sm:$0xf]
        %v706 = vld [vmem:[%s2 + $0x34] sm:$0xf]
        %v707 = vld [vmem:[%s2 + $0x38] sm:$0xf]
        %v708 = vld [vmem:[%s2 + $0x3c] sm:$0xf]
        %v725 = vunpack.c.l.b16 %v693
        %v726 = vunpack.c.l.b16 %v694
        %v727 = vunpack.c.l.b16 %v695
        %v728 = vunpack.c.l.b16 %v696
        %v729 = vunpack.c.l.b16 %v697
        %v730 = vunpack.c.l.b16 %v698
        %v731 = vunpack.c.l.b16 %v699
        %v732 = vunpack.c.l.b16 %v700
        %v733 = vunpack.c.l.b16 %v701
        %v734 = vunpack.c.l.b16 %v702
        %v735 = vunpack.c.l.b16 %v703
        %v736 = vunpack.c.l.b16 %v704
        %v737 = vunpack.c.l.b16 %v705
        %v738 = vunpack.c.l.b16 %v706
        %v739 = vunpack.c.l.b16 %v707
        %v740 = vunpack.c.l.b16 %v708
        %v741 = vpack.c.b16 %v726, %v725
        %v742 = vpack.c.b16 %v728, %v727
        %v743 = vpack.c.b16 %v730, %v729
        %v744 = vpack.c.b16 %v732, %v731
        %v745 = vpack.c.b16 %v734, %v733
        %v746 = vpack.c.b16 %v736, %v735
        %v747 = vpack.c.b16 %v738, %v737
        %v748 = vpack.c.b16 %v740, %v739
        %757 = vmatprep.subr.bf16.mxu0 0
        %758 = vmatpush1.bf16.msra.mxu0 %v741
        %759 = vmatprep.subr.bf16.mxu0 0
        %760 = vmatpush1.bf16.msra.mxu0 %v742
        %761 = vmatprep.subr.bf16.mxu0 0
        %762 = vmatpush1.bf16.msra.mxu0 %v743
        %763 = vmatprep.subr.bf16.mxu0 0
        %764 = vmatpush1.bf16.msra.mxu0 %v744
        %765 = vmatprep.subr.bf16.mxu0 0
        %766 = vmatpush1.bf16.msra.mxu0 %v745
        %767 = vmatprep.subr.bf16.mxu0 0
        %768 = vmatpush1.bf16.msra.mxu0 %v746
        %769 = vmatprep.subr.bf16.mxu0 0
        %770 = vmatpush1.bf16.msra.mxu0 %v747
        %771 = vmatprep.subr.bf16.mxu0 0
        %772 = vmatpush1.bf16.msra.mxu0 %v748
        %773 = vmatprep.subr.bf16.mxu0 0
        %774 = vmatpush1.bf16.msra.mxu0 0
        %775 = vmatprep.subr.bf16.mxu0 0
        %776 = vmatpush1.bf16.msra.mxu0 0
        %777 = vmatprep.subr.bf16.mxu0 0
        %778 = vmatpush1.bf16.msra.mxu0 0
        %779 = vmatprep.subr.bf16.mxu0 0
        %780 = vmatpush1.bf16.msra.mxu0 0
        %781 = vmatprep.subr.bf16.mxu0 0
        %782 = vmatpush1.bf16.msra.mxu0 0
        %783 = vmatprep.subr.bf16.mxu0 0
        %784 = vmatpush1.bf16.msra.mxu0 0
        %785 = vmatprep.subr.bf16.mxu0 0
        %786 = vmatpush1.bf16.msra.mxu0 0
        %787 = vmatprep.subr.bf16.mxu0 0
        %788 = vmatpush1.bf16.msra.mxu0 0
        %789 = vmatprep.mubr.bf16.mxu0 0
        %790 = vmatmul.mubr.bf16.gmra.mrb[0].mxu0 %v685
        %v791 = vpop.f32.mrb[0].mxu0
        %v792 = vadd.f32 0.0, %v791
        %v793 = vpop.f32.mrb[0].mxu0
        %v794 = vpop.f32.mrb[0].mxu0
        %v795 = vadd.f32 0.0, %v794
        %v796 = vpop.f32.mrb[0].mxu0
        %797 = vmatprep.mubr.bf16.mxu0 0
        %798 = vmatmul.mubr.bf16.gmra.mrb[0].mxu0 %v686
        %v799 = vpop.f32.mrb[0].mxu0
        %v800 = vadd.f32 0.0, %v799
        %v801 = vpop.f32.mrb[0].mxu0
        %v802 = vpop.f32.mrb[0].mxu0
        %v803 = vadd.f32 0.0, %v802
        %v804 = vpop.f32.mrb[0].mxu0
        %805 = vmatprep.mubr.bf16.mxu0 0
        %806 = vmatmul.mubr.bf16.gmra.mrb[0].mxu0 %v687
        %v807 = vpop.f32.mrb[0].mxu0
        %v808 = vadd.f32 0.0, %v807
        %v809 = vpop.f32.mrb[0].mxu0
        %v810 = vpop.f32.mrb[0].mxu0
        %v811 = vadd.f32 0.0, %v810
        %v812 = vpop.f32.mrb[0].mxu0
        %813 = vmatprep.mubr.bf16.mxu0 0
        %814 = vmatmul.mubr.bf16.gmra.mrb[0].mxu0 %v688
        %v815 = vpop.f32.mrb[0].mxu0
        %v816 = vadd.f32 0.0, %v815
        %v817 = vpop.f32.mrb[0].mxu0
        %v818 = vpop.f32.mrb[0].mxu0
        %v819 = vadd.f32 0.0, %v818
        %v820 = vpop.f32.mrb[0].mxu0
        %821 = vmatprep.mubr.bf16.mxu0 0
        %822 = vmatmul.mubr.bf16.gmra.mrb[0].mxu0 %v689
        %v823 = vpop.f32.mrb[0].mxu0
        %v824 = vadd.f32 0.0, %v823
        %v825 = vpop.f32.mrb[0].mxu0
        %v826 = vpop.f32.mrb[0].mxu0
        %v827 = vadd.f32 0.0, %v826
        %v828 = vpop.f32.mrb[0].mxu0
        %829 = vmatprep.mubr.bf16.mxu0 0
        %830 = vmatmul.mubr.bf16.gmra.mrb[0].mxu0 %v690
        %v831 = vpop.f32.mrb[0].mxu0
        %v832 = vadd.f32 0.0, %v831
        %v833 = vpop.f32.mrb[0].mxu0
        %v834 = vpop.f32.mrb[0].mxu0
        %v835 = vadd.f32 0.0, %v834
        %v836 = vpop.f32.mrb[0].mxu0
        %837 = vmatprep.mubr.bf16.mxu0 0
        %838 = vmatmul.mubr.bf16.gmra.mrb[0].mxu0 %v691
        %v839 = vpop.f32.mrb[0].mxu0
        %v840 = vadd.f32 0.0, %v839
        %v841 = vpop.f32.mrb[0].mxu0
        %v842 = vpop.f32.mrb[0].mxu0
        %v843 = vadd.f32 0.0, %v842
        %v844 = vpop.f32.mrb[0].mxu0
        %845 = vmatprep.mubr.bf16.mxu0 0
        %846 = vmatmul.mubr.bf16.gmra.mrb[0].mxu0 %v692
        %v847 = vpop.f32.mrb[0].mxu0
        %v848 = vadd.f32 0.0, %v847
        %v849 = vpop.f32.mrb[0].mxu0
        %v850 = vpop.f32.mrb[0].mxu0
        %v851 = vadd.f32 0.0, %v850
        %v852 = vpop.f32.mrb[0].mxu0
        %853 = vdwg.mxu0
        %v854 = vpack.c.bf16 %v795, %v792
        %v855 = vpack.c.bf16 %v803, %v800
        %v856 = vpack.c.bf16 %v811, %v808
        %v857 = vpack.c.bf16 %v819, %v816
        %v858 = vpack.c.bf16 %v827, %v824
        %v859 = vpack.c.bf16 %v835, %v832
        %v860 = vpack.c.bf16 %v843, %v840
        %v861 = vpack.c.bf16 %v851, %v848
        %v870 = vunpack.c.l.b16 %v854
        %v871 = vunpack.c.h.b16 %v854
        %v872 = vunpack.c.l.b16 %v855
        %v873 = vunpack.c.h.b16 %v855
        %v874 = vunpack.c.l.b16 %v856
        %v875 = vunpack.c.h.b16 %v856
        %v876 = vunpack.c.l.b16 %v857
        %v877 = vunpack.c.h.b16 %v857
        %v878 = vunpack.c.l.b16 %v858
        %v879 = vunpack.c.h.b16 %v858
        %v880 = vunpack.c.l.b16 %v859
        %v881 = vunpack.c.h.b16 %v859
        %v882 = vunpack.c.l.b16 %v860
        %v883 = vunpack.c.h.b16 %v860
        %v884 = vunpack.c.l.b16 %v861
        %v885 = vunpack.c.h.b16 %v861
        %v886 = vpack.c.b16 %v870, %v870
        %v887 = vpack.c.b16 %v871, %v871
        %v888 = vpack.c.b16 %v872, %v872
        %v889 = vpack.c.b16 %v873, %v873
        %v890 = vpack.c.b16 %v874, %v874
        %v891 = vpack.c.b16 %v875, %v875
        %v892 = vpack.c.b16 %v876, %v876
        %v893 = vpack.c.b16 %v877, %v877
        %v894 = vpack.c.b16 %v878, %v878
        %v895 = vpack.c.b16 %v879, %v879
        %v896 = vpack.c.b16 %v880, %v880
        %v897 = vpack.c.b16 %v881, %v881
        %v898 = vpack.c.b16 %v882, %v882
        %v899 = vpack.c.b16 %v883, %v883
        %v900 = vpack.c.b16 %v884, %v884
        %v901 = vpack.c.b16 %v885, %v885
        %918 = vst [vmem:[%s230] sm:$0xf] %v886
        %919 = vst [vmem:[%s230 + $0x4] sm:$0xf] %v887
        %920 = vst [vmem:[%s230 + $0x8] sm:$0xf] %v888
        %921 = vst [vmem:[%s230 + $0xc] sm:$0xf] %v889
        %922 = vst [vmem:[%s230 + $0x10] sm:$0xf] %v890
        %923 = vst [vmem:[%s230 + $0x14] sm:$0xf] %v891
        %924 = vst [vmem:[%s230 + $0x18] sm:$0xf] %v892
        %925 = vst [vmem:[%s230 + $0x1c] sm:$0xf] %v893
        %926 = vst [vmem:[%s230 + $0x20] sm:$0xf] %v894
        %927 = vst [vmem:[%s230 + $0x24] sm:$0xf] %v895
        %928 = vst [vmem:[%s230 + $0x28] sm:$0xf] %v896
        %929 = vst [vmem:[%s230 + $0x2c] sm:$0xf] %v897
        %930 = vst [vmem:[%s230 + $0x30] sm:$0xf] %v898
        %931 = vst [vmem:[%s230 + $0x34] sm:$0xf] %v899
        %932 = vst [vmem:[%s230 + $0x38] sm:$0xf] %v900
        %933 = vst [vmem:[%s230 + $0x3c] sm:$0xf] %v901
      $region44: #{node_classifier_forward.4} parent=35 // pred_fallthru
        _
      %s934 = smul.u32 16, %s19
      %p935 = scmp.lt.s32.totalorder %s934, 31
      %s936 = scalar_select %p935, %s934, 31
      %s937 = smul.addr %s936, 4
      %s938 = scalar_lea.vmem %s4, %s937
      // Predicated region
      $region45: #{node_classifier_forward.4} parent=35 // pred_check
        %p939 = pneg %p136
      $region46: #{node_classifier_forward.4} parent=35 // pred_check_branch
        %941 = sbr.rel (%p939) target = $region48
      $region47: #{node_classifier_forward.4} parent=35 // pred_region
        %s942 = smul.u32 16, %s19
      $region48: #{node_classifier_forward.4} parent=35 // pred_fallthru
        _
    $region36: #{node_classifier_forward.4} parent=5 // pred_fallthru
      _
    %p943 = scmp.le.s32.totalorder 2, %s10
    // Predicated region
    $region49: #{node_classifier_forward.4} parent=5 // pred_check
      %p944 = pneg %p943
    $region50: #{node_classifier_forward.4} parent=5 // pred_check_branch
      %946 = sbr.rel (%p944) target = $region52
    $region51: #{node_classifier_forward.4} parent=5 // pred_region
      %s947 = ssub.s32 %s10, 2
      // Predicated region
      $region53: #{node_classifier_forward.4} parent=51 // pred_check
        %p948 = pneg %p142
      $region54: #{node_classifier_forward.4} parent=51 // pred_check_branch
        %950 = sbr.rel (%p948) target = $region56
      $region55: #{node_classifier_forward.4} parent=51 // pred_region
        %s951 = smul.u32 16, %s21
        %p952 = scmp.lt.s32.totalorder %s951, 31
        %s953 = scalar_select %p952, %s951, 31
        %s954 = smul.addr %s953, 4
        %s955 = scalar_lea.vmem %s4, %s954
      $region56: #{node_classifier_forward.4} parent=51 // pred_fallthru
        _
    $region52: #{node_classifier_forward.4} parent=5 // pred_fallthru
      _
  $region6: #{node_classifier_forward.4} parent=0 // loop_footer
    %s14 = sadd.s32 1, %s10
  $region7: #{node_classifier_forward.4} parent=0 // loop_footer_branch
    %9 = sbr.rel target = $region3
  $region8: #{node_classifier_forward.4} parent=0 // loop_exit
    _

// kernel: node_classifier_forward.5
$region0: #{node_classifier_forward.5}
  #allocation0 [shape = 'u32[]', space=smem, size = 0x4, offset = 0x4, fixed_abs, tag = 'smem constant byte address 0x4 - core index']
  #allocation1 [shape = 'u32[144,128]{1,0:T(1,128)}', space=vmem, size = 0x12000, scoped, tag = 'internal scratch']
  #allocation2 [shape = 'f32[128,128]{1,0:T(8,128)}', space=vmem, size = 0x10000, scoped, tag = 'scratch operand']
  %s0 = inlined_call_operand.vmem [shape: bf16[256,256], index: 0, kind: input, shape index: {}]
  %s1 = inlined_call_operand.vmem [shape: bf16[256,128], index: 1, kind: input, shape index: {}]
  %s2 = inlined_call_operand.vmem [shape: bf16[128,128], index: 2, kind: input, shape index: {}]
  %s3 = inlined_call_operand.vmem [shape: f32[1,128], index: 3, kind: input, shape index: {}]
  %s4 = inlined_call_operand.vmem [shape: f32[1,128], index: 4, kind: input, shape index: {}]
  %s5 = inlined_call_operand.vmem [shape: f32[256,128], index: 5, kind: output, shape index: {}]
  %s6 = sld [smem:[#allocation0]]
  $region61: #{node_classifier_forward.5} parent=0
    _
  %s8 = ssub.s32 1, %s6
  %s9 = scalar_select 0, %s8, %s6
  loop: start=0, step=1, limit=4
  $region2: #{node_classifier_forward.5} parent=0 // loop_pre_header
    _
  $region3: #{node_classifier_forward.5} parent=0 // loop_header
    %s11 = sphi 0, %s15
    %p12 = scmp.ge.s32.totalorder %s11, 4
    %s18 = sphi 0, %s30
    %s19 = sphi 0, %s26
    %s20 = sphi 0, %s18
    %s21 = sphi 0, %s19
    %s22 = sphi 0, %s20
    %s23 = sphi 0, %s21
    %s35 = sphi 0, %s37
    %s38 = sphi 0, %s35
    %s39 = sphi 0, %s38
    %s55 = sphi 0, %s39
    %s59 = sphi 0, %s59
    %s61 = sphi 0, %s59
    %s62 = sphi 0, %s61
    %s76 = sphi 0, %s62
    %s80 = sphi 0, %s80
    %s82 = sphi 0, %s80
    %s83 = sphi 0, %s82
    %s97 = sphi 0, %s83
    %s101 = sphi 0, %s101
    %s103 = sphi 0, %s101
    %s104 = sphi 0, %s103
    %s118 = sphi 0, %s104
    %s122 = sphi 0, %s122
    %s124 = sphi 0, %s122
    %s125 = sphi 0, %s124
    %s139 = sphi 0, %s125
    %s145 = sphi 0, %s147
    %s148 = sphi 0, %s145
    %s149 = sphi 0, %s148
    %s165 = sphi 0, %s149
  $region4: #{node_classifier_forward.5} parent=0 // loop_header_branch
    %14 = sbr.rel (%p12) target = $region8
  $region5: #{node_classifier_forward.5} parent=0 // loop_body
    %s16 = ssub.s32 %s11, 1
    %s17 = ssub.s32 %s11, 2
    %s24 = sadd.s32 1, %s19
    %p25 = scmp.ge.s32.totalorder %s24, 1
    %s26 = scalar_select %p25, 0, %s24
    %s27 = sadd.s32 1, %s18
    %s28 = scalar_select %p25, %s27, %s18
    %p29 = scmp.ge.s32.totalorder %s28, 2
    %s30 = scalar_select %p29, 0, %s28
    %s31 = ssub.s32 %s18, %s30
    %s32 = ssub.s32 %s19, %s26
    %s33 = sor.u32 %s31, %s32
    %p34 = scmp.eq.s32.totalorder %s33, 0
    %s36 = sadd.s32 %s35, 1
    %s37 = scalar_select %p34, %s35, %s36
    %p40 = pneg %p34
    %p41 = scmp.eq.s32.totalorder %s11, 1
    %p42 = por %p40, %p41
    %p43 = scmp.ne.s32.totalorder %s35, %s38
    %p44 = scmp.eq.s32.totalorder %s11, 0
    %p45 = por %p43, %p44
    %p46 = scmp.ne.s32.totalorder %s35, %s38
    %p47 = scmp.eq.s32.totalorder %s16, 1
    %p48 = por %p46, %p47
    %p49 = scmp.ne.s32.totalorder %s38, %s39
    %p50 = scmp.eq.s32.totalorder %s16, 0
    %p51 = por %p49, %p50
    %p52 = scmp.ne.s32.totalorder %s38, %s39
    %p53 = scmp.eq.s32.totalorder %s17, 1
    %p54 = por %p52, %p53
    %p56 = scmp.ne.s32.totalorder %s39, %s55
    %p57 = scmp.eq.s32.totalorder %s17, 0
    %p58 = por %p56, %p57
    %s60 = sadd.s32 %s59, 1
    %p63 = scmp.eq.s32.totalorder %s11, 1
    %p64 = scmp.ne.s32.totalorder %s59, %s61
    %p65 = scmp.eq.s32.totalorder %s11, 0
    %p66 = por %p64, %p65
    %p67 = scmp.ne.s32.totalorder %s59, %s61
    %p68 = scmp.eq.s32.totalorder %s16, 1
    %p69 = por %p67, %p68
    %p70 = scmp.ne.s32.totalorder %s61, %s62
    %p71 = scmp.eq.s32.totalorder %s16, 0
    %p72 = por %p70, %p71
    %p73 = scmp.ne.s32.totalorder %s61, %s62
    %p74 = scmp.eq.s32.totalorder %s17, 1
    %p75 = por %p73, %p74
    %p77 = scmp.ne.s32.totalorder %s62, %s76
    %p78 = scmp.eq.s32.totalorder %s17, 0
    %p79 = por %p77, %p78
    %s81 = sadd.s32 %s80, 1
    %p84 = scmp.eq.s32.totalorder %s11, 1
    %p85 = scmp.ne.s32.totalorder %s80, %s82
    %p86 = scmp.eq.s32.totalorder %s11, 0
    %p87 = por %p85, %p86
    %p88 = scmp.ne.s32.totalorder %s80, %s82
    %p89 = scmp.eq.s32.totalorder %s16, 1
    %p90 = por %p88, %p89
    %p91 = scmp.ne.s32.totalorder %s82, %s83
    %p92 = scmp.eq.s32.totalorder %s16, 0
    %p93 = por %p91, %p92
    %p94 = scmp.ne.s32.totalorder %s82, %s83
    %p95 = scmp.eq.s32.totalorder %s17, 1
    %p96 = por %p94, %p95
    %p98 = scmp.ne.s32.totalorder %s83, %s97
    %p99 = scmp.eq.s32.totalorder %s17, 0
    %p100 = por %p98, %p99
    %s102 = sadd.s32 %s101, 1
    %p105 = scmp.eq.s32.totalorder %s11, 1
    %p106 = scmp.ne.s32.totalorder %s101, %s103
    %p107 = scmp.eq.s32.totalorder %s11, 0
    %p108 = por %p106, %p107
    %p109 = scmp.ne.s32.totalorder %s101, %s103
    %p110 = scmp.eq.s32.totalorder %s16, 1
    %p111 = por %p109, %p110
    %p112 = scmp.ne.s32.totalorder %s103, %s104
    %p113 = scmp.eq.s32.totalorder %s16, 0
    %p114 = por %p112, %p113
    %p115 = scmp.ne.s32.totalorder %s103, %s104
    %p116 = scmp.eq.s32.totalorder %s17, 1
    %p117 = por %p115, %p116
    %p119 = scmp.ne.s32.totalorder %s104, %s118
    %p120 = scmp.eq.s32.totalorder %s17, 0
    %p121 = por %p119, %p120
    %s123 = sadd.s32 %s122, 1
    %p126 = scmp.eq.s32.totalorder %s11, 1
    %p127 = scmp.ne.s32.totalorder %s122, %s124
    %p128 = scmp.eq.s32.totalorder %s11, 0
    %p129 = por %p127, %p128
    %p130 = scmp.ne.s32.totalorder %s122, %s124
    %p131 = scmp.eq.s32.totalorder %s16, 1
    %p132 = por %p130, %p131
    %p133 = scmp.ne.s32.totalorder %s124, %s125
    %p134 = scmp.eq.s32.totalorder %s16, 0
    %p135 = por %p133, %p134
    %p136 = scmp.ne.s32.totalorder %s124, %s125
    %p137 = scmp.eq.s32.totalorder %s17, 1
    %p138 = por %p136, %p137
    %p140 = scmp.ne.s32.totalorder %s125, %s139
    %p141 = scmp.eq.s32.totalorder %s17, 0
    %p142 = por %p140, %p141
    %s143 = ssub.s32 %s18, %s30
    %p144 = scmp.eq.s32.totalorder %s143, 0
    %s146 = sadd.s32 %s145, 1
    %s147 = scalar_select %p144, %s145, %s146
    %p150 = pneg %p144
    %p151 = scmp.eq.s32.totalorder %s11, 1
    %p152 = por %p150, %p151
    %p153 = scmp.ne.s32.totalorder %s145, %s148
    %p154 = scmp.eq.s32.totalorder %s11, 0
    %p155 = por %p153, %p154
    %p156 = scmp.ne.s32.totalorder %s145, %s148
    %p157 = scmp.eq.s32.totalorder %s16, 1
    %p158 = por %p156, %p157
    %p159 = scmp.ne.s32.totalorder %s148, %s149
    %p160 = scmp.eq.s32.totalorder %s16, 0
    %p161 = por %p159, %p160
    %p162 = scmp.ne.s32.totalorder %s148, %s149
    %p163 = scmp.eq.s32.totalorder %s17, 1
    %p164 = por %p162, %p163
    %p166 = scmp.ne.s32.totalorder %s149, %s165
    %p167 = scmp.eq.s32.totalorder %s17, 0
    %p168 = por %p166, %p167
    %p169 = scmp.le.s32.totalorder 1, %s11
    %p170 = scmp.lt.s32.totalorder %s11, 3
    %p171 = pnand %p169, %p170
    %p172 = pneg %p171
    // Predicated region
    $region9: #{node_classifier_forward.5} parent=5 // pred_check
      _
    $region10: #{node_classifier_forward.5} parent=5 // pred_check_branch
      %174 = sbr.rel (%p171) target = $region12
    $region11: #{node_classifier_forward.5} parent=5 // pred_region
      %s175 = ssub.s32 %s11, 1
      // Predicated region
      $region13: #{node_classifier_forward.5} parent=11 // pred_check
        %p176 = pneg %p72
      $region14: #{node_classifier_forward.5} parent=11 // pred_check_branch
        %178 = sbr.rel (%p176) target = $region16
      $region15: #{node_classifier_forward.5} parent=11 // pred_region
        _
      $region16: #{node_classifier_forward.5} parent=11 // pred_fallthru
        _
      // Predicated region
      $region17: #{node_classifier_forward.5} parent=11 // pred_check
        %p179 = pneg %p93
      $region18: #{node_classifier_forward.5} parent=11 // pred_check_branch
        %181 = sbr.rel (%p179) target = $region20
      $region19: #{node_classifier_forward.5} parent=11 // pred_region
        _
      $region20: #{node_classifier_forward.5} parent=11 // pred_fallthru
        _
      // Predicated region
      $region21: #{node_classifier_forward.5} parent=11 // pred_check
        %p182 = pneg %p114
      $region22: #{node_classifier_forward.5} parent=11 // pred_check_branch
        %184 = sbr.rel (%p182) target = $region24
      $region23: #{node_classifier_forward.5} parent=11 // pred_region
        _
      $region24: #{node_classifier_forward.5} parent=11 // pred_fallthru
        _
      // Predicated region
      $region25: #{node_classifier_forward.5} parent=11 // pred_check
        %p185 = pneg %p135
      $region26: #{node_classifier_forward.5} parent=11 // pred_check_branch
        %187 = sbr.rel (%p185) target = $region28
      $region27: #{node_classifier_forward.5} parent=11 // pred_region
        _
      $region28: #{node_classifier_forward.5} parent=11 // pred_fallthru
        _
    $region12: #{node_classifier_forward.5} parent=5 // pred_fallthru
      _
    %p188 = scmp.lt.s32.totalorder %s11, 2
    // Predicated region
    $region29: #{node_classifier_forward.5} parent=5 // pred_check
      %p189 = pneg %p188
    $region30: #{node_classifier_forward.5} parent=5 // pred_check_branch
      %191 = sbr.rel (%p189) target = $region32
    $region31: #{node_classifier_forward.5} parent=5 // pred_region
      // Predicated region
      $region33: #{node_classifier_forward.5} parent=31 // pred_check
        %p192 = pneg %p45
      $region34: #{node_classifier_forward.5} parent=31 // pred_check_branch
        %194 = sbr.rel (%p192) target = $region36
      $region35: #{node_classifier_forward.5} parent=31 // pred_region
        %s195 = smul.u32 16, %s18
        %s196 = smul.u32 2, %s19
        %p197 = scmp.lt.s32.totalorder %s195, 31
        %s198 = scalar_select %p197, %s195, 31
        %p199 = scmp.lt.s32.totalorder %s196, 1
        %s200 = scalar_select %p199, %s196, 1
        %s201 = smul.addr %s198, 2
        %s202 = sadd.s32 %s200, %s201
        %s203 = smul.addr %s202, 4
        %s204 = scalar_lea.vmem %s0, %s203
        %s205 = smul.u32 16, %s18
        %s206 = smul.u32 2, %s19
      $region36: #{node_classifier_forward.5} parent=31 // pred_fallthru
        _
    $region32: #{node_classifier_forward.5} parent=5 // pred_fallthru
      _
    %p207 = scmp.le.s32.totalorder 1, %s11
    %p208 = scmp.lt.s32.totalorder %s11, 3
    %p209 = pnand %p207, %p208
    %p210 = pneg %p209
    // Predicated region
    $region37: #{node_classifier_forward.5} parent=5 // pred_check
      _
    $region38: #{node_classifier_forward.5} parent=5 // pred_check_branch
      %212 = sbr.rel (%p209) target = $region40
    $region39: #{node_classifier_forward.5} parent=5 // pred_region
      %s213 = ssub.s32 %s11, 1
      %s214 = smul.u32 16, %s20
      %s215 = smul.u32 2, %s21
      %p216 = scmp.lt.s32.totalorder %s214, 31
      %s217 = scalar_select %p216, %s214, 31
      %p218 = scmp.lt.s32.totalorder %s215, 1
      %s219 = scalar_select %p218, %s215, 1
      %s220 = smul.addr %s217, 2
      %s221 = sadd.s32 %s219, %s220
      %s222 = smul.addr %s221, 4
      %s223 = scalar_lea.vmem %s0, %s222
      %p224 = pneg %p51
      %p225 = pneg %p48
      %p226 = pneg %p72
      %p227 = pneg %p69
      %p228 = pneg %p93
      %p229 = pneg %p90
      %p230 = pneg %p114
      %p231 = pneg %p111
      %p232 = pneg %p135
      %p233 = pneg %p132
      %p234 = pneg %p161
      %p235 = pneg %p158
      %s236 = smul.u32 16, %s20
      %p237 = scmp.lt.s32.totalorder %s236, 31
      %s238 = scalar_select %p237, %s236, 31
      %s239 = smul.addr %s238, 8
      %s240 = scalar_lea.vmem %s5, %s239
      %s241 = smul.u32 16, %s20
      %s242 = smul.u32 2, %s21
      %p243 = scmp.lt.s32.totalorder %s241, 31
      %s244 = scalar_select %p243, %s241, 31
      %p245 = scmp.lt.s32.totalorder %s242, 1
      %s246 = scalar_select %p245, %s242, 1
      %s247 = smul.addr %s244, 2
      %s248 = sadd.s32 %s246, %s247
      %s249 = smul.addr %s248, 4
      %s250 = scalar_lea.vmem %s0, %s249
      %s251 = smul.u32 16, %s20
      %s252 = smul.u32 2, %s21
      %s253 = smul.u32 16, %s20
      %p254 = scmp.lt.s32.totalorder %s253, 31
      %s255 = scalar_select %p254, %s253, 31
      %s256 = smul.addr %s255, 8
      %s257 = scalar_lea.vmem %s5, %s256
      %s258 = smul.u32 16, %s20
      %p260 = scmp.eq.s32.totalorder %s21, 0
      // Predicated region
      $region41: #{node_classifier_forward.5} parent=39 // pred_check
        %p261 = pneg %p260
      $region42: #{node_classifier_forward.5} parent=39 // pred_check_branch
        %263 = sbr.rel (%p261) target = $region44
      $region43: #{node_classifier_forward.5} parent=39 // pred_region
        %264 = vst [vmem:[#allocation2] sm:$0xff] 0.0
        %265 = vst [vmem:[#allocation2 + $0x8] sm:$0xff] 0.0
        %266 = vst [vmem:[#allocation2 + $0x10] sm:$0xff] 0.0
        %267 = vst [vmem:[#allocation2 + $0x18] sm:$0xff] 0.0
        %268 = vst [vmem:[#allocation2 + $0x20] sm:$0xff] 0.0
        %269 = vst [vmem:[#allocation2 + $0x28] sm:$0xff] 0.0
        %270 = vst [vmem:[#allocation2 + $0x30] sm:$0xff] 0.0
        %271 = vst [vmem:[#allocation2 + $0x38] sm:$0xff] 0.0
        %272 = vst [vmem:[#allocation2 + $0x40] sm:$0xff] 0.0
        %273 = vst [vmem:[#allocation2 + $0x48] sm:$0xff] 0.0
        %274 = vst [vmem:[#allocation2 + $0x50] sm:$0xff] 0.0
        %275 = vst [vmem:[#allocation2 + $0x58] sm:$0xff] 0.0
        %276 = vst [vmem:[#allocation2 + $0x60] sm:$0xff] 0.0
        %277 = vst [vmem:[#allocation2 + $0x68] sm:$0xff] 0.0
        %278 = vst [vmem:[#allocation2 + $0x70] sm:$0xff] 0.0
        %279 = vst [vmem:[#allocation2 + $0x78] sm:$0xff] 0.0
      $region44: #{node_classifier_forward.5} parent=39 // pred_fallthru
        _
      %s280 = smul.u32 %s21, 256
      %s281 = sshra.s32 %s280, 3
      %s282 = sand.u32 %s280, 7
      %s283 = smul.addr %s281, 4
      %s284 = scalar_lea.vmem %s1, %s283
      %v285 = vld [vmem:[%s284] sm:$0xf]
      %v286 = vld [vmem:[%s284 + $0x4] sm:$0xf]
      %v287 = vld [vmem:[%s284 + $0x8] sm:$0xf]
      %v288 = vld [vmem:[%s284 + $0xc] sm:$0xf]
      %v289 = vld [vmem:[%s284 + $0x10] sm:$0xf]
      %v290 = vld [vmem:[%s284 + $0x14] sm:$0xf]
      %v291 = vld [vmem:[%s284 + $0x18] sm:$0xf]
      %v292 = vld [vmem:[%s284 + $0x1c] sm:$0xf]
      %v293 = vld [vmem:[%s284 + $0x20] sm:$0xf]
      %v294 = vld [vmem:[%s284 + $0x24] sm:$0xf]
      %v295 = vld [vmem:[%s284 + $0x28] sm:$0xf]
      %v296 = vld [vmem:[%s284 + $0x2c] sm:$0xf]
      %v297 = vld [vmem:[%s284 + $0x30] sm:$0xf]
      %v298 = vld [vmem:[%s284 + $0x34] sm:$0xf]
      %v299 = vld [vmem:[%s284 + $0x38] sm:$0xf]
      %v300 = vld [vmem:[%s284 + $0x3c] sm:$0xf]
      %v301 = vld [vmem:[%s284 + $0x40] sm:$0xf]
      %v302 = vld [vmem:[%s284 + $0x44] sm:$0xf]
      %v303 = vld [vmem:[%s284 + $0x48] sm:$0xf]
      %v304 = vld [vmem:[%s284 + $0x4c] sm:$0xf]
      %v305 = vld [vmem:[%s284 + $0x50] sm:$0xf]
      %v306 = vld [vmem:[%s284 + $0x54] sm:$0xf]
      %v307 = vld [vmem:[%s284 + $0x58] sm:$0xf]
      %v308 = vld [vmem:[%s284 + $0x5c] sm:$0xf]
      %v309 = vld [vmem:[%s284 + $0x60] sm:$0xf]
      %v310 = vld [vmem:[%s284 + $0x64] sm:$0xf]
      %v311 = vld [vmem:[%s284 + $0x68] sm:$0xf]
      %v312 = vld [vmem:[%s284 + $0x6c] sm:$0xf]
      %v313 = vld [vmem:[%s284 + $0x70] sm:$0xf]
      %v314 = vld [vmem:[%s284 + $0x74] sm:$0xf]
      %v315 = vld [vmem:[%s284 + $0x78] sm:$0xf]
      %v316 = vld [vmem:[%s284 + $0x7c] sm:$0xf]
      %v317 = vld [vmem:[#allocation2] sm:$0xff]
      %v318 = vld [vmem:[#allocation2 + $0x8] sm:$0xff]
      %v319 = vld [vmem:[#allocation2 + $0x10] sm:$0xff]
      %v320 = vld [vmem:[#allocation2 + $0x18] sm:$0xff]
      %v321 = vld [vmem:[#allocation2 + $0x20] sm:$0xff]
      %v322 = vld [vmem:[#allocation2 + $0x28] sm:$0xff]
      %v323 = vld [vmem:[#allocation2 + $0x30] sm:$0xff]
      %v324 = vld [vmem:[#allocation2 + $0x38] sm:$0xff]
      %v325 = vld [vmem:[#allocation2 + $0x40] sm:$0xff]
      %v326 = vld [vmem:[#allocation2 + $0x48] sm:$0xff]
      %v327 = vld [vmem:[#allocation2 + $0x50] sm:$0xff]
      %v328 = vld [vmem:[#allocation2 + $0x58] sm:$0xff]
      %v329 = vld [vmem:[#allocation2 + $0x60] sm:$0xff]
      %v330 = vld [vmem:[#allocation2 + $0x68] sm:$0xff]
      %v331 = vld [vmem:[#allocation2 + $0x70] sm:$0xff]
      %v332 = vld [vmem:[#allocation2 + $0x78] sm:$0xff]
      %v333 = vld [vmem:[%s250] sm:$0xff]
      %v334 = vld [vmem:[%s250 + $0x8] sm:$0xff]
      %v335 = vld [vmem:[%s250 + $0x10] sm:$0xff]
      %v336 = vld [vmem:[%s250 + $0x18] sm:$0xff]
      %v337 = vld [vmem:[%s250 + $0x20] sm:$0xff]
      %v338 = vld [vmem:[%s250 + $0x28] sm:$0xff]
      %v339 = vld [vmem:[%s250 + $0x30] sm:$0xff]
      %v340 = vld [vmem:[%s250 + $0x38] sm:$0xff]
      %v341 = vld [vmem:[%s250 + $0x40] sm:$0xff]
      %v342 = vld [vmem:[%s250 + $0x48] sm:$0xff]
      %v343 = vld [vmem:[%s250 + $0x50] sm:$0xff]
      %v344 = vld [vmem:[%s250 + $0x58] sm:$0xff]
      %v345 = vld [vmem:[%s250 + $0x60] sm:$0xff]
      %v346 = vld [vmem:[%s250 + $0x68] sm:$0xff]
      %v347 = vld [vmem:[%s250 + $0x70] sm:$0xff]
      %v348 = vld [vmem:[%s250 + $0x78] sm:$0xff]
      %v365 = vunpack.c.l.b16 %v333
      %v366 = vunpack.c.h.b16 %v333
      %v367 = vunpack.c.l.b16 %v334
      %v368 = vunpack.c.h.b16 %v334
      %v369 = vunpack.c.l.b16 %v335
      %v370 = vunpack.c.h.b16 %v335
      %v371 = vunpack.c.l.b16 %v336
      %v372 = vunpack.c.h.b16 %v336
      %v373 = vunpack.c.l.b16 %v337
      %v374 = vunpack.c.h.b16 %v337
      %v375 = vunpack.c.l.b16 %v338
      %v376 = vunpack.c.h.b16 %v338
      %v377 = vunpack.c.l.b16 %v339
      %v378 = vunpack.c.h.b16 %v339
      %v379 = vunpack.c.l.b16 %v340
      %v380 = vunpack.c.h.b16 %v340
      %v381 = vunpack.c.l.b16 %v341
      %v382 = vunpack.c.h.b16 %v341
      %v383 = vunpack.c.l.b16 %v342
      %v384 = vunpack.c.h.b16 %v342
      %v385 = vunpack.c.l.b16 %v343
      %v386 = vunpack.c.h.b16 %v343
      %v387 = vunpack.c.l.b16 %v344
      %v388 = vunpack.c.h.b16 %v344
      %v389 = vunpack.c.l.b16 %v345
      %v390 = vunpack.c.h.b16 %v345
      %v391 = vunpack.c.l.b16 %v346
      %v392 = vunpack.c.h.b16 %v346
      %v393 = vunpack.c.l.b16 %v347
      %v394 = vunpack.c.h.b16 %v347
      %v395 = vunpack.c.l.b16 %v348
      %v396 = vunpack.c.h.b16 %v348
      %v397 = vpack.c.b16 %v367, %v365
      %v398 = vpack.c.b16 %v368, %v366
      %v399 = vpack.c.b16 %v371, %v369
      %v400 = vpack.c.b16 %v372, %v370
      %v401 = vpack.c.b16 %v375, %v373
      %v402 = vpack.c.b16 %v376, %v374
      %v403 = vpack.c.b16 %v379, %v377
      %v404 = vpack.c.b16 %v380, %v378
      %v405 = vpack.c.b16 %v383, %v381
      %v406 = vpack.c.b16 %v384, %v382
      %v407 = vpack.c.b16 %v387, %v385
      %v408 = vpack.c.b16 %v388, %v386
      %v409 = vpack.c.b16 %v391, %v389
      %v410 = vpack.c.b16 %v392, %v390
      %v411 = vpack.c.b16 %v395, %v393
      %v412 = vpack.c.b16 %v396, %v394
      %v461 = vunpack.c.l.b16 %v285
      %v462 = vunpack.c.l.b16 %v286
      %v463 = vunpack.c.l.b16 %v287
      %v464 = vunpack.c.l.b16 %v288
      %v465 = vunpack.c.l.b16 %v289
      %v466 = vunpack.c.l.b16 %v290
      %v467 = vunpack.c.l.b16 %v291
      %v468 = vunpack.c.l.b16 %v292
      %v469 = vunpack.c.l.b16 %v293
      %v470 = vunpack.c.l.b16 %v294
      %v471 = vunpack.c.l.b16 %v295
      %v472 = vunpack.c.l.b16 %v296
      %v473 = vunpack.c.l.b16 %v297
      %v474 = vunpack.c.l.b16 %v298
      %v475 = vunpack.c.l.b16 %v299
      %v476 = vunpack.c.l.b16 %v300
      %v477 = vunpack.c.l.b16 %v301
      %v478 = vunpack.c.l.b16 %v302
      %v479 = vunpack.c.l.b16 %v303
      %v480 = vunpack.c.l.b16 %v304
      %v481 = vunpack.c.l.b16 %v305
      %v482 = vunpack.c.l.b16 %v306
      %v483 = vunpack.c.l.b16 %v307
      %v484 = vunpack.c.l.b16 %v308
      %v485 = vunpack.c.l.b16 %v309
      %v486 = vunpack.c.l.b16 %v310
      %v487 = vunpack.c.l.b16 %v311
      %v488 = vunpack.c.l.b16 %v312
      %v489 = vunpack.c.l.b16 %v313
      %v490 = vunpack.c.l.b16 %v314
      %v491 = vunpack.c.l.b16 %v315
      %v492 = vunpack.c.l.b16 %v316
      %v493 = vpack.c.b16 %v462, %v461
      %v494 = vpack.c.b16 %v464, %v463
      %v495 = vpack.c.b16 %v466, %v465
      %v496 = vpack.c.b16 %v468, %v467
      %v497 = vpack.c.b16 %v470, %v469
      %v498 = vpack.c.b16 %v472, %v471
      %v499 = vpack.c.b16 %v474, %v473
      %v500 = vpack.c.b16 %v476, %v475
      %v501 = vpack.c.b16 %v478, %v477
      %v502 = vpack.c.b16 %v480, %v479
      %v503 = vpack.c.b16 %v482, %v481
      %v504 = vpack.c.b16 %v484, %v483
      %v505 = vpack.c.b16 %v486, %v485
      %v506 = vpack.c.b16 %v488, %v487
      %v507 = vpack.c.b16 %v490, %v489
      %v508 = vpack.c.b16 %v492, %v491
      %525 = vmatprep.subr.bf16.mxu0 0
      %526 = vmatpush1.bf16.msra.mxu0 %v493
      %527 = vmatprep.subr.bf16.mxu0 0
      %528 = vmatpush1.bf16.msra.mxu0 %v494
      %529 = vmatprep.subr.bf16.mxu0 0
      %530 = vmatpush1.bf16.msra.mxu0 %v495
      %531 = vmatprep.subr.bf16.mxu0 0
      %532 = vmatpush1.bf16.msra.mxu0 %v496
      %533 = vmatprep.subr.bf16.mxu0 0
      %534 = vmatpush1.bf16.msra.mxu0 %v497
      %535 = vmatprep.subr.bf16.mxu0 0
      %536 = vmatpush1.bf16.msra.mxu0 %v498
      %537 = vmatprep.subr.bf16.mxu0 0
      %538 = vmatpush1.bf16.msra.mxu0 %v499
      %539 = vmatprep.subr.bf16.mxu0 0
      %540 = vmatpush1.bf16.msra.mxu0 %v500
      %541 = vmatprep.subr.bf16.mxu0 0
      %542 = vmatpush1.bf16.msra.mxu0 %v501
      %543 = vmatprep.subr.bf16.mxu0 0
      %544 = vmatpush1.bf16.msra.mxu0 %v502
      %545 = vmatprep.subr.bf16.mxu0 0
      %546 = vmatpush1.bf16.msra.mxu0 %v503
      %547 = vmatprep.subr.bf16.mxu0 0
      %548 = vmatpush1.bf16.msra.mxu0 %v504
      %549 = vmatprep.subr.bf16.mxu0 0
      %550 = vmatpush1.bf16.msra.mxu0 %v505
      %551 = vmatprep.subr.bf16.mxu0 0
      %552 = vmatpush1.bf16.msra.mxu0 %v506
      %553 = vmatprep.subr.bf16.mxu0 0
      %554 = vmatpush1.bf16.msra.mxu0 %v507
      %555 = vmatprep.subr.bf16.mxu0 0
      %556 = vmatpush1.bf16.msra.mxu0 %v508
      %557 = vmatprep.mubr.bf16.mxu0 %v398
      %558 = vmatmul.mubr.bf16.gmra.mrb[0].mxu0 %v397
      %v559 = vpop.f32.mrb[0].mxu0
      %v560 = vadd.f32 0.0, %v559
      %v561 = vpop.f32.mrb[0].mxu0
      %v562 = vpop.f32.mrb[0].mxu0
      %v563 = vadd.f32 0.0, %v562
      %v564 = vpop.f32.mrb[0].mxu0
      %565 = vmatprep.mubr.bf16.mxu0 %v400
      %566 = vmatmul.mubr.bf16.gmra.mrb[0].mxu0 %v399
      %v567 = vpop.f32.mrb[0].mxu0
      %v568 = vadd.f32 0.0, %v567
      %v569 = vpop.f32.mrb[0].mxu0
      %v570 = vpop.f32.mrb[0].mxu0
      %v571 = vadd.f32 0.0, %v570
      %v572 = vpop.f32.mrb[0].mxu0
      %573 = vmatprep.mubr.bf16.mxu0 %v402
      %574 = vmatmul.mubr.bf16.gmra.mrb[0].mxu0 %v401
      %v575 = vpop.f32.mrb[0].mxu0
      %v576 = vadd.f32 0.0, %v575
      %v577 = vpop.f32.mrb[0].mxu0
      %v578 = vpop.f32.mrb[0].mxu0
      %v579 = vadd.f32 0.0, %v578
      %v580 = vpop.f32.mrb[0].mxu0
      %581 = vmatprep.mubr.bf16.mxu0 %v404
      %582 = vmatmul.mubr.bf16.gmra.mrb[0].mxu0 %v403
      %v583 = vpop.f32.mrb[0].mxu0
      %v584 = vadd.f32 0.0, %v583
      %v585 = vpop.f32.mrb[0].mxu0
      %v586 = vpop.f32.mrb[0].mxu0
      %v587 = vadd.f32 0.0, %v586
      %v588 = vpop.f32.mrb[0].mxu0
      %589 = vmatprep.mubr.bf16.mxu0 %v406
      %590 = vmatmul.mubr.bf16.gmra.mrb[0].mxu0 %v405
      %v591 = vpop.f32.mrb[0].mxu0
      %v592 = vadd.f32 0.0, %v591
      %v593 = vpop.f32.mrb[0].mxu0
      %v594 = vpop.f32.mrb[0].mxu0
      %v595 = vadd.f32 0.0, %v594
      %v596 = vpop.f32.mrb[0].mxu0
      %597 = vmatprep.mubr.bf16.mxu0 %v408
      %598 = vmatmul.mubr.bf16.gmra.mrb[0].mxu0 %v407
      %v599 = vpop.f32.mrb[0].mxu0
      %v600 = vadd.f32 0.0, %v599
      %v601 = vpop.f32.mrb[0].mxu0
      %v602 = vpop.f32.mrb[0].mxu0
      %v603 = vadd.f32 0.0, %v602
      %v604 = vpop.f32.mrb[0].mxu0
      %605 = vmatprep.mubr.bf16.mxu0 %v410
      %606 = vmatmul.mubr.bf16.gmra.mrb[0].mxu0 %v409
      %v607 = vpop.f32.mrb[0].mxu0
      %v608 = vadd.f32 0.0, %v607
      %v609 = vpop.f32.mrb[0].mxu0
      %v610 = vpop.f32.mrb[0].mxu0
      %v611 = vadd.f32 0.0, %v610
      %v612 = vpop.f32.mrb[0].mxu0
      %613 = vmatprep.mubr.bf16.mxu0 %v412
      %614 = vmatmul.mubr.bf16.gmra.mrb[0].mxu0 %v411
      %v615 = vpop.f32.mrb[0].mxu0
      %v616 = vadd.f32 0.0, %v615
      %v617 = vpop.f32.mrb[0].mxu0
      %v618 = vpop.f32.mrb[0].mxu0
      %v619 = vadd.f32 0.0, %v618
      %v620 = vpop.f32.mrb[0].mxu0
      %621 = vdwg.mxu0
      %v622 = vadd.f32 %v317, %v560
      %v623 = vadd.f32 %v318, %v563
      %v624 = vadd.f32 %v319, %v568
      %v625 = vadd.f32 %v320, %v571
      %v626 = vadd.f32 %v321, %v576
      %v627 = vadd.f32 %v322, %v579
      %v628 = vadd.f32 %v323, %v584
      %v629 = vadd.f32 %v324, %v587
      %v630 = vadd.f32 %v325, %v592
      %v631 = vadd.f32 %v326, %v595
      %v632 = vadd.f32 %v327, %v600
      %v633 = vadd.f32 %v328, %v603
      %v634 = vadd.f32 %v329, %v608
      %v635 = vadd.f32 %v330, %v611
      %v636 = vadd.f32 %v331, %v616
      %v637 = vadd.f32 %v332, %v619
      %638 = vst [vmem:[#allocation2] sm:$0xff] %v622
      %639 = vst [vmem:[#allocation2 + $0x8] sm:$0xff] %v623
      %640 = vst [vmem:[#allocation2 + $0x10] sm:$0xff] %v624
      %641 = vst [vmem:[#allocation2 + $0x18] sm:$0xff] %v625
      %642 = vst [vmem:[#allocation2 + $0x20] sm:$0xff] %v626
      %643 = vst [vmem:[#allocation2 + $0x28] sm:$0xff] %v627
      %644 = vst [vmem:[#allocation2 + $0x30] sm:$0xff] %v628
      %645 = vst [vmem:[#allocation2 + $0x38] sm:$0xff] %v629
      %646 = vst [vmem:[#allocation2 + $0x40] sm:$0xff] %v630
      %647 = vst [vmem:[#allocation2 + $0x48] sm:$0xff] %v631
      %648 = vst [vmem:[#allocation2 + $0x50] sm:$0xff] %v632
      %649 = vst [vmem:[#allocation2 + $0x58] sm:$0xff] %v633
      %650 = vst [vmem:[#allocation2 + $0x60] sm:$0xff] %v634
      %651 = vst [vmem:[#allocation2 + $0x68] sm:$0xff] %v635
      %652 = vst [vmem:[#allocation2 + $0x70] sm:$0xff] %v636
      %653 = vst [vmem:[#allocation2 + $0x78] sm:$0xff] %v637
      // Predicated region
      $region45: #{node_classifier_forward.5} parent=39 // pred_check
        %p654 = pneg %p260
      $region46: #{node_classifier_forward.5} parent=39 // pred_check_branch
        %656 = sbr.rel (%p654) target = $region48
      $region47: #{node_classifier_forward.5} parent=39 // pred_region
        %v657 = vld [vmem:[#allocation2] sm:$0xff]
        %v658 = vld [vmem:[#allocation2 + $0x8] sm:$0xff]
        %v659 = vld [vmem:[#allocation2 + $0x10] sm:$0xff]
        %v660 = vld [vmem:[#allocation2 + $0x18] sm:$0xff]
        %v661 = vld [vmem:[#allocation2 + $0x20] sm:$0xff]
        %v662 = vld [vmem:[#allocation2 + $0x28] sm:$0xff]
        %v663 = vld [vmem:[#allocation2 + $0x30] sm:$0xff]
        %v664 = vld [vmem:[#allocation2 + $0x38] sm:$0xff]
        %v665 = vld [vmem:[#allocation2 + $0x40] sm:$0xff]
        %v666 = vld [vmem:[#allocation2 + $0x48] sm:$0xff]
        %v667 = vld [vmem:[#allocation2 + $0x50] sm:$0xff]
        %v668 = vld [vmem:[#allocation2 + $0x58] sm:$0xff]
        %v669 = vld [vmem:[#allocation2 + $0x60] sm:$0xff]
        %v670 = vld [vmem:[#allocation2 + $0x68] sm:$0xff]
        %v671 = vld [vmem:[#allocation2 + $0x70] sm:$0xff]
        %v672 = vld [vmem:[#allocation2 + $0x78] sm:$0xff]
        %v673 = vld [vmem:[%s3] sm:$0x1]
        %v675 = vlaneseq
        %v676 = vshrl.u32 %v675, 7
        %v677 = vsub.s32 0, %v676
        %v678 = vrot.slane %v673, %v677
        %v680 = vadd.f32 %v657, %v678
        %v681 = vadd.f32 %v658, %v678
        %v682 = vadd.f32 %v659, %v678
        %v683 = vadd.f32 %v660, %v678
        %v684 = vadd.f32 %v661, %v678
        %v685 = vadd.f32 %v662, %v678
        %v686 = vadd.f32 %v663, %v678
        %v687 = vadd.f32 %v664, %v678
        %v688 = vadd.f32 %v665, %v678
        %v689 = vadd.f32 %v666, %v678
        %v690 = vadd.f32 %v667, %v678
        %v691 = vadd.f32 %v668, %v678
        %v692 = vadd.f32 %v669, %v678
        %v693 = vadd.f32 %v670, %v678
        %v694 = vadd.f32 %v671, %v678
        %v695 = vadd.f32 %v672, %v678
        %v696 = vpack.c.bf16 %v681, %v680
        %v697 = vpack.c.bf16 %v683, %v682
        %v698 = vpack.c.bf16 %v685, %v684
        %v699 = vpack.c.bf16 %v687, %v686
        %v700 = vpack.c.bf16 %v689, %v688
        %v701 = vpack.c.bf16 %v691, %v690
        %v702 = vpack.c.bf16 %v693, %v692
        %v703 = vpack.c.bf16 %v695, %v694
        %v704 = vld [vmem:[%s2] sm:$0xf]
        %v705 = vld [vmem:[%s2 + $0x4] sm:$0xf]
        %v706 = vld [vmem:[%s2 + $0x8] sm:$0xf]
        %v707 = vld [vmem:[%s2 + $0xc] sm:$0xf]
        %v708 = vld [vmem:[%s2 + $0x10] sm:$0xf]
        %v709 = vld [vmem:[%s2 + $0x14] sm:$0xf]
        %v710 = vld [vmem:[%s2 + $0x18] sm:$0xf]
        %v711 = vld [vmem:[%s2 + $0x1c] sm:$0xf]
        %v712 = vld [vmem:[%s2 + $0x20] sm:$0xf]
        %v713 = vld [vmem:[%s2 + $0x24] sm:$0xf]
        %v714 = vld [vmem:[%s2 + $0x28] sm:$0xf]
        %v715 = vld [vmem:[%s2 + $0x2c] sm:$0xf]
        %v716 = vld [vmem:[%s2 + $0x30] sm:$0xf]
        %v717 = vld [vmem:[%s2 + $0x34] sm:$0xf]
        %v718 = vld [vmem:[%s2 + $0x38] sm:$0xf]
        %v719 = vld [vmem:[%s2 + $0x3c] sm:$0xf]
        %v720 = vld [vmem:[%s4] sm:$0x1]
        %v722 = vlaneseq
        %v723 = vshrl.u32 %v722, 7
        %v724 = vsub.s32 0, %v723
        %v725 = vrot.slane %v720, %v724
        %v743 = vunpack.c.l.b16 %v704
        %v744 = vunpack.c.l.b16 %v705
        %v745 = vunpack.c.l.b16 %v706
        %v746 = vunpack.c.l.b16 %v707
        %v747 = vunpack.c.l.b16 %v708
        %v748 = vunpack.c.l.b16 %v709
        %v749 = vunpack.c.l.b16 %v710
        %v750 = vunpack.c.l.b16 %v711
        %v751 = vunpack.c.l.b16 %v712
        %v752 = vunpack.c.l.b16 %v713
        %v753 = vunpack.c.l.b16 %v714
        %v754 = vunpack.c.l.b16 %v715
        %v755 = vunpack.c.l.b16 %v716
        %v756 = vunpack.c.l.b16 %v717
        %v757 = vunpack.c.l.b16 %v718
        %v758 = vunpack.c.l.b16 %v719
        %v759 = vpack.c.b16 %v744, %v743
        %v760 = vpack.c.b16 %v746, %v745
        %v761 = vpack.c.b16 %v748, %v747
        %v762 = vpack.c.b16 %v750, %v749
        %v763 = vpack.c.b16 %v752, %v751
        %v764 = vpack.c.b16 %v754, %v753
        %v765 = vpack.c.b16 %v756, %v755
        %v766 = vpack.c.b16 %v758, %v757
        %775 = vmatprep.subr.bf16.mxu0 0
        %776 = vmatpush1.bf16.msra.mxu0 %v759
        %777 = vmatprep.subr.bf16.mxu0 0
        %778 = vmatpush1.bf16.msra.mxu0 %v760
        %779 = vmatprep.subr.bf16.mxu0 0
        %780 = vmatpush1.bf16.msra.mxu0 %v761
        %781 = vmatprep.subr.bf16.mxu0 0
        %782 = vmatpush1.bf16.msra.mxu0 %v762
        %783 = vmatprep.subr.bf16.mxu0 0
        %784 = vmatpush1.bf16.msra.mxu0 %v763
        %785 = vmatprep.subr.bf16.mxu0 0
        %786 = vmatpush1.bf16.msra.mxu0 %v764
        %787 = vmatprep.subr.bf16.mxu0 0
        %788 = vmatpush1.bf16.msra.mxu0 %v765
        %789 = vmatprep.subr.bf16.mxu0 0
        %790 = vmatpush1.bf16.msra.mxu0 %v766
        %791 = vmatprep.subr.bf16.mxu0 0
        %792 = vmatpush1.bf16.msra.mxu0 0
        %793 = vmatprep.subr.bf16.mxu0 0
        %794 = vmatpush1.bf16.msra.mxu0 0
        %795 = vmatprep.subr.bf16.mxu0 0
        %796 = vmatpush1.bf16.msra.mxu0 0
        %797 = vmatprep.subr.bf16.mxu0 0
        %798 = vmatpush1.bf16.msra.mxu0 0
        %799 = vmatprep.subr.bf16.mxu0 0
        %800 = vmatpush1.bf16.msra.mxu0 0
        %801 = vmatprep.subr.bf16.mxu0 0
        %802 = vmatpush1.bf16.msra.mxu0 0
        %803 = vmatprep.subr.bf16.mxu0 0
        %804 = vmatpush1.bf16.msra.mxu0 0
        %805 = vmatprep.subr.bf16.mxu0 0
        %806 = vmatpush1.bf16.msra.mxu0 0
        %807 = vmatprep.mubr.bf16.mxu0 0
        %808 = vmatmul.mubr.bf16.gmra.mrb[0].mxu0 %v696
        %v809 = vpop.f32.mrb[0].mxu0
        %v810 = vadd.f32 %v725, %v809
        %v811 = vpop.f32.mrb[0].mxu0
        %v812 = vpop.f32.mrb[0].mxu0
        %v813 = vadd.f32 %v725, %v812
        %v814 = vpop.f32.mrb[0].mxu0
        %815 = vmatprep.mubr.bf16.mxu0 0
        %816 = vmatmul.mubr.bf16.gmra.mrb[0].mxu0 %v697
        %v817 = vpop.f32.mrb[0].mxu0
        %v818 = vadd.f32 %v725, %v817
        %v819 = vpop.f32.mrb[0].mxu0
        %v820 = vpop.f32.mrb[0].mxu0
        %v821 = vadd.f32 %v725, %v820
        %v822 = vpop.f32.mrb[0].mxu0
        %823 = vmatprep.mubr.bf16.mxu0 0
        %824 = vmatmul.mubr.bf16.gmra.mrb[0].mxu0 %v698
        %v825 = vpop.f32.mrb[0].mxu0
        %v826 = vadd.f32 %v725, %v825
        %v827 = vpop.f32.mrb[0].mxu0
        %v828 = vpop.f32.mrb[0].mxu0
        %v829 = vadd.f32 %v725, %v828
        %v830 = vpop.f32.mrb[0].mxu0
        %831 = vmatprep.mubr.bf16.mxu0 0
        %832 = vmatmul.mubr.bf16.gmra.mrb[0].mxu0 %v699
        %v833 = vpop.f32.mrb[0].mxu0
        %v834 = vadd.f32 %v725, %v833
        %v835 = vpop.f32.mrb[0].mxu0
        %v836 = vpop.f32.mrb[0].mxu0
        %v837 = vadd.f32 %v725, %v836
        %v838 = vpop.f32.mrb[0].mxu0
        %839 = vmatprep.mubr.bf16.mxu0 0
        %840 = vmatmul.mubr.bf16.gmra.mrb[0].mxu0 %v700
        %v841 = vpop.f32.mrb[0].mxu0
        %v842 = vadd.f32 %v725, %v841
        %v843 = vpop.f32.mrb[0].mxu0
        %v844 = vpop.f32.mrb[0].mxu0
        %v845 = vadd.f32 %v725, %v844
        %v846 = vpop.f32.mrb[0].mxu0
        %847 = vmatprep.mubr.bf16.mxu0 0
        %848 = vmatmul.mubr.bf16.gmra.mrb[0].mxu0 %v701
        %v849 = vpop.f32.mrb[0].mxu0
        %v850 = vadd.f32 %v725, %v849
        %v851 = vpop.f32.mrb[0].mxu0
        %v852 = vpop.f32.mrb[0].mxu0
        %v853 = vadd.f32 %v725, %v852
        %v854 = vpop.f32.mrb[0].mxu0
        %855 = vmatprep.mubr.bf16.mxu0 0
        %856 = vmatmul.mubr.bf16.gmra.mrb[0].mxu0 %v702
        %v857 = vpop.f32.mrb[0].mxu0
        %v858 = vadd.f32 %v725, %v857
        %v859 = vpop.f32.mrb[0].mxu0
        %v860 = vpop.f32.mrb[0].mxu0
        %v861 = vadd.f32 %v725, %v860
        %v862 = vpop.f32.mrb[0].mxu0
        %863 = vmatprep.mubr.bf16.mxu0 0
        %864 = vmatmul.mubr.bf16.gmra.mrb[0].mxu0 %v703
        %v865 = vpop.f32.mrb[0].mxu0
        %v866 = vadd.f32 %v725, %v865
        %v867 = vpop.f32.mrb[0].mxu0
        %v868 = vpop.f32.mrb[0].mxu0
        %v869 = vadd.f32 %v725, %v868
        %v870 = vpop.f32.mrb[0].mxu0
        %871 = vdwg.mxu0
        %v872 = vlaneseq
        %v873 = vand.u32 %v872, 127
        %vm874 = vcmp.lt.s32.totalorder %v873, 8
        %v875 = vsel %vm874, %v810, -1e+30
        %v876 = vsel %vm874, %v813, -1e+30
        %v877 = vsel %vm874, %v818, -1e+30
        %v878 = vsel %vm874, %v821, -1e+30
        %v879 = vsel %vm874, %v826, -1e+30
        %v880 = vsel %vm874, %v829, -1e+30
        %v881 = vsel %vm874, %v834, -1e+30
        %v882 = vsel %vm874, %v837, -1e+30
        %v883 = vsel %vm874, %v842, -1e+30
        %v884 = vsel %vm874, %v845, -1e+30
        %v885 = vsel %vm874, %v850, -1e+30
        %v886 = vsel %vm874, %v853, -1e+30
        %v887 = vsel %vm874, %v858, -1e+30
        %v888 = vsel %vm874, %v861, -1e+30
        %v889 = vsel %vm874, %v866, -1e+30
        %v890 = vsel %vm874, %v869, -1e+30
        %891 = vmax.xlane.f32.xlu0 %v875
        %v892 = vpop.xlane.xlu0 %891
        %893 = vmax.xlane.f32.xlu0 %v876
        %v894 = vpop.xlane.xlu0 %893
        %895 = vmax.xlane.f32.xlu0 %v877
        %v896 = vpop.xlane.xlu0 %895
        %897 = vmax.xlane.f32.xlu0 %v878
        %v898 = vpop.xlane.xlu0 %897
        %899 = vmax.xlane.f32.xlu0 %v879
        %v900 = vpop.xlane.xlu0 %899
        %901 = vmax.xlane.f32.xlu0 %v880
        %v902 = vpop.xlane.xlu0 %901
        %903 = vmax.xlane.f32.xlu0 %v881
        %v904 = vpop.xlane.xlu0 %903
        %905 = vmax.xlane.f32.xlu0 %v882
        %v906 = vpop.xlane.xlu0 %905
        %907 = vmax.xlane.f32.xlu0 %v883
        %v908 = vpop.xlane.xlu0 %907
        %909 = vmax.xlane.f32.xlu0 %v884
        %v910 = vpop.xlane.xlu0 %909
        %911 = vmax.xlane.f32.xlu0 %v885
        %v912 = vpop.xlane.xlu0 %911
        %913 = vmax.xlane.f32.xlu0 %v886
        %v914 = vpop.xlane.xlu0 %913
        %915 = vmax.xlane.f32.xlu0 %v887
        %v916 = vpop.xlane.xlu0 %915
        %917 = vmax.xlane.f32.xlu0 %v888
        %v918 = vpop.xlane.xlu0 %917
        %919 = vmax.xlane.f32.xlu0 %v889
        %v920 = vpop.xlane.xlu0 %919
        %921 = vmax.xlane.f32.xlu0 %v890
        %v922 = vpop.xlane.xlu0 %921
        %v923 = vsub.f32 %v875, %v892
        %v924 = vsub.f32 %v876, %v894
        %v925 = vsub.f32 %v877, %v896
        %v926 = vsub.f32 %v878, %v898
        %v927 = vsub.f32 %v879, %v900
        %v928 = vsub.f32 %v880, %v902
        %v929 = vsub.f32 %v881, %v904
        %v930 = vsub.f32 %v882, %v906
        %v931 = vsub.f32 %v883, %v908
        %v932 = vsub.f32 %v884, %v910
        %v933 = vsub.f32 %v885, %v912
        %v934 = vsub.f32 %v886, %v914
        %v935 = vsub.f32 %v887, %v916
        %v936 = vsub.f32 %v888, %v918
        %v937 = vsub.f32 %v889, %v920
        %v938 = vsub.f32 %v890, %v922
        %v939 = vmul.f32 %v923, 1.442695
        %v940 = vpow.pop %v939
        %v941 = vmul.f32 %v924, 1.442695
        %v942 = vpow.pop %v941
        %v943 = vmul.f32 %v925, 1.442695
        %v944 = vpow.pop %v943
        %v945 = vmul.f32 %v926, 1.442695
        %v946 = vpow.pop %v945
        %v947 = vmul.f32 %v927, 1.442695
        %v948 = vpow.pop %v947
        %v949 = vmul.f32 %v928, 1.442695
        %v950 = vpow.pop %v949
        %v951 = vmul.f32 %v929, 1.442695
        %v952 = vpow.pop %v951
        %v953 = vmul.f32 %v930, 1.442695
        %v954 = vpow.pop %v953
        %v955 = vmul.f32 %v931, 1.442695
        %v956 = vpow.pop %v955
        %v957 = vmul.f32 %v932, 1.442695
        %v958 = vpow.pop %v957
        %v959 = vmul.f32 %v933, 1.442695
        %v960 = vpow.pop %v959
        %v961 = vmul.f32 %v934, 1.442695
        %v962 = vpow.pop %v961
        %v963 = vmul.f32 %v935, 1.442695
        %v964 = vpow.pop %v963
        %v965 = vmul.f32 %v936, 1.442695
        %v966 = vpow.pop %v965
        %v967 = vmul.f32 %v937, 1.442695
        %v968 = vpow.pop %v967
        %v969 = vmul.f32 %v938, 1.442695
        %v970 = vpow.pop %v969
        %v971 = vsel %vm874, %v940, 0.0
        %v972 = vsel %vm874, %v942, 0.0
        %v973 = vsel %vm874, %v944, 0.0
        %v974 = vsel %vm874, %v946, 0.0
        %v975 = vsel %vm874, %v948, 0.0
        %v976 = vsel %vm874, %v950, 0.0
        %v977 = vsel %vm874, %v952, 0.0
        %v978 = vsel %vm874, %v954, 0.0
        %v979 = vsel %vm874, %v956, 0.0
        %v980 = vsel %vm874, %v958, 0.0
        %v981 = vsel %vm874, %v960, 0.0
        %v982 = vsel %vm874, %v962, 0.0
        %v983 = vsel %vm874, %v964, 0.0
        %v984 = vsel %vm874, %v966, 0.0
        %v985 = vsel %vm874, %v968, 0.0
        %v986 = vsel %vm874, %v970, 0.0
        %987 = vadd.xlane.f32.xlu0 %v971
        %v988 = vpop.xlane.xlu0 %987
        %989 = vadd.xlane.f32.xlu0 %v972
        %v990 = vpop.xlane.xlu0 %989
        %991 = vadd.xlane.f32.xlu0 %v973
        %v992 = vpop.xlane.xlu0 %991
        %993 = vadd.xlane.f32.xlu0 %v974
        %v994 = vpop.xlane.xlu0 %993
        %995 = vadd.xlane.f32.xlu0 %v975
        %v996 = vpop.xlane.xlu0 %995
        %997 = vadd.xlane.f32.xlu0 %v976
        %v998 = vpop.xlane.xlu0 %997
        %999 = vadd.xlane.f32.xlu0 %v977
        %v1000 = vpop.xlane.xlu0 %999
        %1001 = vadd.xlane.f32.xlu0 %v978
        %v1002 = vpop.xlane.xlu0 %1001
        %1003 = vadd.xlane.f32.xlu0 %v979
        %v1004 = vpop.xlane.xlu0 %1003
        %1005 = vadd.xlane.f32.xlu0 %v980
        %v1006 = vpop.xlane.xlu0 %1005
        %1007 = vadd.xlane.f32.xlu0 %v981
        %v1008 = vpop.xlane.xlu0 %1007
        %1009 = vadd.xlane.f32.xlu0 %v982
        %v1010 = vpop.xlane.xlu0 %1009
        %1011 = vadd.xlane.f32.xlu0 %v983
        %v1012 = vpop.xlane.xlu0 %1011
        %1013 = vadd.xlane.f32.xlu0 %v984
        %v1014 = vpop.xlane.xlu0 %1013
        %1015 = vadd.xlane.f32.xlu0 %v985
        %v1016 = vpop.xlane.xlu0 %1015
        %1017 = vadd.xlane.f32.xlu0 %v986
        %v1018 = vpop.xlane.xlu0 %1017
        %v1019 = vlog2.pop %v988
        %v1020 = vmul.f32 %v1019, 0.6931472
        %v1021 = vlog2.pop %v990
        %v1022 = vmul.f32 %v1021, 0.6931472
        %v1023 = vlog2.pop %v992
        %v1024 = vmul.f32 %v1023, 0.6931472
        %v1025 = vlog2.pop %v994
        %v1026 = vmul.f32 %v1025, 0.6931472
        %v1027 = vlog2.pop %v996
        %v1028 = vmul.f32 %v1027, 0.6931472
        %v1029 = vlog2.pop %v998
        %v1030 = vmul.f32 %v1029, 0.6931472
        %v1031 = vlog2.pop %v1000
        %v1032 = vmul.f32 %v1031, 0.6931472
        %v1033 = vlog2.pop %v1002
        %v1034 = vmul.f32 %v1033, 0.6931472
        %v1035 = vlog2.pop %v1004
        %v1036 = vmul.f32 %v1035, 0.6931472
        %v1037 = vlog2.pop %v1006
        %v1038 = vmul.f32 %v1037, 0.6931472
        %v1039 = vlog2.pop %v1008
        %v1040 = vmul.f32 %v1039, 0.6931472
        %v1041 = vlog2.pop %v1010
        %v1042 = vmul.f32 %v1041, 0.6931472
        %v1043 = vlog2.pop %v1012
        %v1044 = vmul.f32 %v1043, 0.6931472
        %v1045 = vlog2.pop %v1014
        %v1046 = vmul.f32 %v1045, 0.6931472
        %v1047 = vlog2.pop %v1016
        %v1048 = vmul.f32 %v1047, 0.6931472
        %v1049 = vlog2.pop %v1018
        %v1050 = vmul.f32 %v1049, 0.6931472
        %v1051 = vsub.f32 %v923, %v1020
        %v1052 = vsub.f32 %v924, %v1022
        %v1053 = vsub.f32 %v925, %v1024
        %v1054 = vsub.f32 %v926, %v1026
        %v1055 = vsub.f32 %v927, %v1028
        %v1056 = vsub.f32 %v928, %v1030
        %v1057 = vsub.f32 %v929, %v1032
        %v1058 = vsub.f32 %v930, %v1034
        %v1059 = vsub.f32 %v931, %v1036
        %v1060 = vsub.f32 %v932, %v1038
        %v1061 = vsub.f32 %v933, %v1040
        %v1062 = vsub.f32 %v934, %v1042
        %v1063 = vsub.f32 %v935, %v1044
        %v1064 = vsub.f32 %v936, %v1046
        %v1065 = vsub.f32 %v937, %v1048
        %v1066 = vsub.f32 %v938, %v1050
        %1067 = vst [vmem:[%s257] sm:$0xff] %v1051
        %1068 = vst [vmem:[%s257 + $0x8] sm:$0xff] %v1052
        %1069 = vst [vmem:[%s257 + $0x10] sm:$0xff] %v1053
        %1070 = vst [vmem:[%s257 + $0x18] sm:$0xff] %v1054
        %1071 = vst [vmem:[%s257 + $0x20] sm:$0xff] %v1055
        %1072 = vst [vmem:[%s257 + $0x28] sm:$0xff] %v1056
        %1073 = vst [vmem:[%s257 + $0x30] sm:$0xff] %v1057
        %1074 = vst [vmem:[%s257 + $0x38] sm:$0xff] %v1058
        %1075 = vst [vmem:[%s257 + $0x40] sm:$0xff] %v1059
        %1076 = vst [vmem:[%s257 + $0x48] sm:$0xff] %v1060
        %1077 = vst [vmem:[%s257 + $0x50] sm:$0xff] %v1061
        %1078 = vst [vmem:[%s257 + $0x58] sm:$0xff] %v1062
        %1079 = vst [vmem:[%s257 + $0x60] sm:$0xff] %v1063
        %1080 = vst [vmem:[%s257 + $0x68] sm:$0xff] %v1064
        %1081 = vst [vmem:[%s257 + $0x70] sm:$0xff] %v1065
        %1082 = vst [vmem:[%s257 + $0x78] sm:$0xff] %v1066
      $region48: #{node_classifier_forward.5} parent=39 // pred_fallthru
        _
      %s1083 = smul.u32 16, %s20
      %p1084 = scmp.lt.s32.totalorder %s1083, 31
      %s1085 = scalar_select %p1084, %s1083, 31
      %s1086 = smul.addr %s1085, 8
      %s1087 = scalar_lea.vmem %s5, %s1086
      // Predicated region
      $region49: #{node_classifier_forward.5} parent=39 // pred_check
        %p1088 = pneg %p158
      $region50: #{node_classifier_forward.5} parent=39 // pred_check_branch
        %1090 = sbr.rel (%p1088) target = $region52
      $region51: #{node_classifier_forward.5} parent=39 // pred_region
        %s1091 = smul.u32 16, %s20
      $region52: #{node_classifier_forward.5} parent=39 // pred_fallthru
        _
    $region40: #{node_classifier_forward.5} parent=5 // pred_fallthru
      _
    %p1092 = scmp.le.s32.totalorder 2, %s11
    // Predicated region
    $region53: #{node_classifier_forward.5} parent=5 // pred_check
      %p1093 = pneg %p1092
    $region54: #{node_classifier_forward.5} parent=5 // pred_check_branch
      %1095 = sbr.rel (%p1093) target = $region56
    $region55: #{node_classifier_forward.5} parent=5 // pred_region
      %s1096 = ssub.s32 %s11, 2
      // Predicated region
      $region57: #{node_classifier_forward.5} parent=55 // pred_check
        %p1097 = pneg %p164
      $region58: #{node_classifier_forward.5} parent=55 // pred_check_branch
        %1099 = sbr.rel (%p1097) target = $region60
      $region59: #{node_classifier_forward.5} parent=55 // pred_region
        %s1100 = smul.u32 16, %s22
        %p1101 = scmp.lt.s32.totalorder %s1100, 31
        %s1102 = scalar_select %p1101, %s1100, 31
        %s1103 = smul.addr %s1102, 8
        %s1104 = scalar_lea.vmem %s5, %s1103
      $region60: #{node_classifier_forward.5} parent=55 // pred_fallthru
        _
    $region56: #{node_classifier_forward.5} parent=5 // pred_fallthru
      _
  $region6: #{node_classifier_forward.5} parent=0 // loop_footer
    %s15 = sadd.s32 1, %s11
  $region7: #{node_classifier_forward.5} parent=0 // loop_footer_branch
    %10 = sbr.rel target = $region3
  $region8: #{node_classifier_forward.5} parent=0 // loop_exit
    _

</llo_original>
